<compile_context>
chip_gen: v7x
topology: tpu7x:2x2x1
jax: 0.10.0
libtpu: 0.0.40
codegen_flags: <defaults>
</compile_context>

<pallas_src>
import functools
import math

import jax
import jax.numpy as jnp
from jax import lax
from jax.experimental import pallas as pl
from jax.experimental.pallas import tpu as pltpu


# ---------------------------------------------------------------------------
# Kernel
# ---------------------------------------------------------------------------
def _bilstm_kernel(gin_ref, wbd_ref, wg_ref, bg_ref, out_ref, hseq_ref,
                   *, seq_len, batch_tile, hidden, unroll):
    """Fused bidirectional LSTM recurrence + output projection.

    gin_ref : (T, TB, 8H) f32   pre-computed gate pre-activations, layout
                                [i_f,i_b | f_f,f_b | g_f,g_b | o_f,o_b];
                                the *_b columns of row t already belong to
                                original time T-1-t (flipped on the host).
    wbd_ref : (2H, 8H) bf16     block-diagonal recurrent weight (same layout).
    wg_ref  : (2H, H)  bf16     fused output projection (rows: [fwd | bwd]).
    bg_ref  : (1, H)   f32      output bias.
    out_ref : (T, TB, H) f32
    hseq_ref: (T*TB, 2H) f32    scratch, cols [:H]=h_fwd(t), [H:]=h_bwd(t).
    """
    T, TB, H = seq_len, batch_tile, hidden
    H2 = 2 * H

    wbd = wbd_ref[...]                    # hoisted once; (2H, 8H) bf16
    mm_dtype = wbd.dtype

    def sig(v):                           # tanh-form sigmoid: single EUP op
        return 0.5 * jnp.tanh(0.5 * v) + 0.5

    def step(t, carry):
        h, c = carry                      # h: (TB, 2H) bf16, c: (TB, 2H) f32
        gx = gin_ref[t]                   # (TB, 8H) contiguous lane-dense load
        # one fused recurrent matmul for both directions (N = 8H)
        gates = gx + jnp.dot(h, wbd, preferred_element_type=jnp.float32)
        i = sig(gates[:, 0 * H2:1 * H2])
        f = sig(gates[:, 1 * H2:2 * H2])
        g = jnp.tanh(gates[:, 2 * H2:3 * H2])
        o = sig(gates[:, 3 * H2:4 * H2])
        c_new = f * c + i * g
        h_new = o * jnp.tanh(c_new)                       # f32
        rf = pl.multiple_of(t * TB, TB)                   # fwd -> time t
        rb = pl.multiple_of((T - 1 - t) * TB, TB)         # bwd -> time T-1-t
        hseq_ref[pl.ds(rf, TB), 0:H] = h_new[:, 0:H]
        hseq_ref[pl.ds(rb, TB), H:H2] = h_new[:, H:H2]
        return h_new.astype(mm_dtype), c_new

    h0 = jnp.zeros((TB, H2), mm_dtype)
    c0 = jnp.zeros((TB, H2), jnp.float32)
    lax.fori_loop(0, T, step, (h0, c0), unroll=unroll)

    # fused output projection: (T*TB, 2H) @ (2H, H), bf16 operands, f32 accum
    out2d = (jnp.dot(hseq_ref[...].astype(mm_dtype), wg_ref[...],
                     preferred_element_type=jnp.float32)
             + bg_ref[...])                                # (T*TB, H)
    out_ref[...] = out2d.reshape(T, TB, H)


# ---------------------------------------------------------------------------
# Host-side helpers
# ---------------------------------------------------------------------------
def _pick_batch_tile(batch, hidden):
    """Batch tile: multiple of 8 (f32 sublanes), <=128 (MXU rows), capped by
    the vreg pressure of the (h bf16 + c f32) recurrence carry, preferring
    >=2 grid steps (so the 'parallel' batch axis can shard across v7x's two
    TensorCores), then minimal padding, then the largest tile."""
    b8 = -(-batch // 8) * 8
    # carry bytes per batch row = 2H * (2 + 4); keep well under half the
    # 256 KiB vreg file to avoid spills inside the serial time loop.
    cap = max(8, min(128, ((96 * 1024) // (12 * hidden)) // 8 * 8))
    if b8 <= 8:
        return 8
    best_key, best_tb = None, 8
    for tb in range(8, min(cap, b8) + 1, 8):
        steps = -(-batch // tb)
        pad = steps * tb - batch
        key = (0 if steps >= 2 else 1, pad, -tb)
        if best_key is None or key < best_key:
            best_key, best_tb = key, tb
    return best_tb


def _vmem_limit_bytes(T, TB, H):
    lane = 128
    pad = lambda n: -(-n // lane) * lane
    gin_blk = T * TB * pad(8 * H) * 4            # f32 input block
    out_blk = T * TB * pad(H) * 4                # f32 output block
    hseq = T * TB * pad(2 * H) * 4               # f32 scratch
    weights = (2 * H * pad(8 * H) + 2 * H * pad(H) + pad(H)) * 2  # bf16
    est = 2 * (gin_blk + out_blk + weights) + hseq   # 2x for double-buffering
    return int(min(max(2 * est, 16 * 1024 * 1024), 48 * 1024 * 1024))


def _prepare_weights(params, matmul_dtype=jnp.bfloat16):
    """Convert PyTorch-layout G_LSTM params into the kernel's fused layout."""
    H = params["weight_hh_l0"].shape[1]
    w_in_f = params["weight_ih_l0"].T                    # (in_dim, 4H) [i,f,g,o]
    w_in_b = params["weight_ih_l0_reverse"].T
    b_f = params["bias_ih_l0"] + params["bias_hh_l0"]    # (4H,)
    b_b = params["bias_ih_l0_reverse"] + params["bias_hh_l0_reverse"]

    # block-diagonal recurrent weight, interleaved gate layout
    # rows 0:H (h_fwd) -> cols {i_f, f_f, g_f, o_f}; rows H:2H (h_bwd) -> bwd cols
    whf = params["weight_hh_l0"].T.reshape(H, 4, H)
    whb = params["weight_hh_l0_reverse"].T.reshape(H, 4, H)
    z = jnp.zeros_like(whf)
    top = jnp.stack([whf, z], axis=2).reshape(H, 8 * H)
    bot = jnp.stack([z, whb], axis=2).reshape(H, 8 * H)
    w_bd = jnp.concatenate([top, bot], axis=0).astype(matmul_dtype)   # (2H, 8H)

    w_g = params["glinear_weight"].T.astype(matmul_dtype)             # (2H, H)
    b_g = params["glinear_bias"].reshape(1, H).astype(jnp.float32)
    return dict(w_in_f=w_in_f, w_in_b=w_in_b, b_f=b_f, b_b=b_b,
                w_bd=w_bd, w_g=w_g, b_g=b_g)


def g_lstm_forward(x, params, *, batch_tile=None):
    """x: (B, T, in_dim) f32. Returns (out (B, T, H), x), matching G_LSTM."""
    B, T, in_dim = x.shape
    H = params["weight_hh_l0"].shape[1]
    prep = _prepare_weights(params)

    # ---- input projection + gate interleave in XLA (in_dim << 128: keeping
    # this inside the kernel would pad the 4-wide last dim to 128 lanes).
    gx_f = jnp.einsum("bti,ig->btg", x, prep["w_in_f"]) + prep["b_f"]   # (B,T,4H)
    gx_b = (jnp.einsum("bti,ig->btg", x[:, ::-1, :], prep["w_in_b"])
            + prep["b_b"])                      # row t holds original time T-1-t
    gin = jnp.stack([gx_f.reshape(B, T, 4, H),
                     gx_b.reshape(B, T, 4, H)], axis=3).reshape(B, T, 8 * H)

    TB = _pick_batch_tile(B, H) if batch_tile is None else batch_tile
    B_pad = -(-B // TB) * TB
    if B_pad != B:
        gin = jnp.pad(gin, ((0, B_pad - B), (0, 0), (0, 0)))
    gin = jnp.transpose(gin, (1, 0, 2))          # time-major (T, B_pad, 8H)

    unroll = True if T <= 16 else 4              # full unroll for short T
    kernel = functools.partial(_bilstm_kernel, seq_len=T, batch_tile=TB,
                               hidden=H, unroll=unroll)

    def rep(shape):  # replicated (full-array) weight block
        return pl.BlockSpec(shape, lambda b: (0,) * len(shape))

    # NOTE: weight blocks are tiny here; default double-buffering is accepted.
    # For very long T at large TB, chunk T (two kernel calls with carried h/c)
    # to stay within the v7x 64 MiB VMEM budget.
    out_tbd = pl.pallas_call(
        kernel,
        out_shape=jax.ShapeDtypeStruct((T, B_pad, H), jnp.float32),
        grid_spec=pltpu.PrefetchScalarGridSpec(
            num_scalar_prefetch=0,
            grid=(B_pad // TB,),
            in_specs=[
                pl.BlockSpec((T, TB, 8 * H), lambda b: (0, b, 0)),  # gates_in
                rep((2 * H, 8 * H)),                                # w_hh blockdiag
                rep((2 * H, H)),                                    # w_g fused
                rep((1, H)),                                        # b_g
            ],
            out_specs=pl.BlockSpec((T, TB, H), lambda b: (0, b, 0)),
            scratch_shapes=[pltpu.VMEM((T * TB, 2 * H), jnp.float32)],
        ),
        compiler_params=pltpu.CompilerParams(
            dimension_semantics=("parallel",),
            vmem_limit_bytes=_vmem_limit_bytes(T, TB, H)),
    )(gin, prep["w_bd"], prep["w_g"], prep["b_g"])

    out = jnp.transpose(out_tbd, (1, 0, 2))[:B]   # (B, T, H)
    return out, x


# ---------------------------------------------------------------------------
# Pure-JAX f32 reference (mirrors PyTorch bidirectional LSTM + Linear)
# ---------------------------------------------------------------------------
def reference_forward(x, params):
    H = params["weight_hh_l0"].shape[1]

    def direction(x_seq, w_ih, w_hh, b_ih, b_hh):
        gx = jnp.einsum("tbi,gi->tbg", x_seq, w_ih) + b_ih + b_hh   # (T,B,4H)

        def cell(carry, g):
            h, c = carry
            gates = g + h @ w_hh.T
            i = jax.nn.sigmoid(gates[:, 0:H])
            f = jax.nn.sigmoid(gates[:, H:2 * H])
            gg = jnp.tanh(gates[:, 2 * H:3 * H])
            o = jax.nn.sigmoid(gates[:, 3 * H:4 * H])
            c = f * c + i * gg
            h = o * jnp.tanh(c)
            return (h, c), h

        Bn = x_seq.shape[1]
        init = (jnp.zeros((Bn, H), jnp.float32), jnp.zeros((Bn, H), jnp.float32))
        _, hs = lax.scan(cell, init, gx)
        return hs                                                    # (T,B,H)

    xt = jnp.swapaxes(x, 0, 1)
    hf = direction(xt, params["weight_ih_l0"], params["weight_hh_l0"],
                   params["bias_ih_l0"], params["bias_hh_l0"])
    hb = direction(xt[::-1], params["weight_ih_l0_reverse"],
                   params["weight_hh_l0_reverse"],
                   params["bias_ih_l0_reverse"],
                   params["bias_hh_l0_reverse"])[::-1]
    h = jnp.concatenate([hf, hb], axis=-1)                           # (T,B,2H)
    out = jnp.einsum("tbk,hk->tbh", h, params["glinear_weight"]) \
        + params["glinear_bias"]
    return jnp.swapaxes(out, 0, 1), x


def make_params(key, in_dim, hidden):
    """Random params in PyTorch nn.LSTM / nn.Linear layout and naming."""
    H = hidden
    ks = jax.random.split(key, 10)
    s = 1.0 / math.sqrt(H)
    u = lambda k, shape: jax.random.uniform(k, shape, jnp.float32, -s, s)
    return {
        "weight_ih_l0": u(ks[0], (4 * H, in_dim)),
        "weight_hh_l0": u(ks[1], (4 * H, H)),
        "bias_ih_l0": u(ks[2], (4 * H,)),
        "bias_hh_l0": u(ks[3], (4 * H,)),
        "weight_ih_l0_reverse": u(ks[4], (4 * H, in_dim)),
        "weight_hh_l0_reverse": u(ks[5], (4 * H, H)),
        "bias_ih_l0_reverse": u(ks[6], (4 * H,)),
        "bias_hh_l0_reverse": u(ks[7], (4 * H,)),
        "glinear_weight": u(ks[8], (H, 2 * H)),
        "glinear_bias": u(ks[9], (H,)),
    }


if __name__ == "__main__":
    B, T, in_dim, hidden = 2, 8, 4, 32

    key = jax.random.PRNGKey(0)
    kx, kp = jax.random.split(key)
    x = jax.random.normal(kx, (B, T, in_dim), dtype=jnp.float32)
    params = make_params(kp, in_dim, hidden)

    out, x_ret = g_lstm_forward(x, params)
    out = jax.block_until_ready(out)

    out_ref, _ = reference_forward(x, params)
    assert out.shape == (B, T, hidden), "bad output shape"
    # kernel matmuls use bf16 operands (f32 accumulation) -> relaxed tolerance
    assert jnp.allclose(out, out_ref, rtol=2e-2, atol=2e-2), "output mismatch"
    assert jnp.array_equal(x_ret, x), "x passthrough mismatch"

    print("KERNEL_OK")
</pallas_src>

<mosaic_0001>
module attributes {stable_mosaic.version = 11 : i64} {
  func.func @_bilstm_kernel(%arg0: i32, %arg1: memref<8x8x256xf32, #tpu.memory_space<vmem>>, %arg2: memref<64x256xbf16, #tpu.memory_space<vmem>>, %arg3: memref<64x32xbf16, #tpu.memory_space<vmem>>, %arg4: memref<1x32xf32, #tpu.memory_space<vmem>>, %arg5: memref<8x8x32xf32, #tpu.memory_space<vmem>>, %arg6: memref<64x64xf32, #tpu.memory_space<vmem>>) attributes {dimension_semantics = [#tpu.dimension_semantics<parallel>], iteration_bounds = array<i64: 1>, scalar_prefetch = 0 : i64, scratch_operands = 1 : i64, tpu.core_type = #tpu.core_type<tc>, window_params = [{transform_indices = @transform_0, window_bounds = array<i64: 8, 8, 256>}, {pipeline_mode = #tpu.pipeline_mode<synchronous>, transform_indices = @transform_1, window_bounds = array<i64: 64, 256>}, {pipeline_mode = #tpu.pipeline_mode<synchronous>, transform_indices = @transform_2, window_bounds = array<i64: 64, 32>}, {pipeline_mode = #tpu.pipeline_mode<synchronous>, transform_indices = @transform_3, window_bounds = array<i64: 1, 32>}, {transform_indices = @transform_4, window_bounds = array<i64: 8, 8, 32>}]} {
    %c0 = arith.constant 0 : index
    %c0_0 = arith.constant 0 : index
    %0 = vector.load %arg2[%c0, %c0_0] : memref<64x256xbf16, #tpu.memory_space<vmem>>, vector<64x256xbf16>
    %cst = arith.constant 0.000000e+00 : bf16
    %1 = vector.broadcast %cst : bf16 to vector<8x64xbf16>
    %cst_1 = arith.constant 0.000000e+00 : f32
    %2 = vector.broadcast %cst_1 : f32 to vector<8x64xf32>
    %c0_i32 = arith.constant 0 : i32
    %3 = arith.index_cast %c0_i32 : i32 to index
    %c0_2 = arith.constant 0 : index
    %c0_3 = arith.constant 0 : index
    %4 = vector.load %arg1[%3, %c0_2, %c0_3] : memref<8x8x256xf32, #tpu.memory_space<vmem>>, vector<1x8x256xf32>
    %5 = vector.shape_cast %4 : vector<1x8x256xf32> to vector<8x256xf32>
    %cst_4 = arith.constant dense<0.000000e+00> : vector<8x256xf32>
    %6 = tpu.matmul %1, %0, %cst_4 {dimension_numbers = #tpu.dot_dimension_numbers<[1], [0], [0], [1], [0, 0, 1, 1], [], []>} : vector<8x64xbf16>, vector<64x256xbf16>, vector<8x256xf32> -> vector<8x256xf32>
    %7 = arith.addf %5, %6 : vector<8x256xf32>
    %8 = vector.extract_strided_slice %7 {offsets = [0, 0], sizes = [8, 64], strides = [1, 1]} : vector<8x256xf32> to vector<8x64xf32>
    %cst_5 = arith.constant 5.000000e-01 : f32
    %9 = vector.broadcast %cst_5 : f32 to vector<8x64xf32>
    %10 = arith.mulf %9, %8 : vector<8x64xf32>
    %11 = math.tanh %10 : vector<8x64xf32>
    %cst_6 = arith.constant 5.000000e-01 : f32
    %12 = vector.broadcast %cst_6 : f32 to vector<8x64xf32>
    %13 = arith.mulf %12, %11 : vector<8x64xf32>
    %cst_7 = arith.constant 5.000000e-01 : f32
    %14 = vector.broadcast %cst_7 : f32 to vector<8x64xf32>
    %15 = arith.addf %13, %14 : vector<8x64xf32>
    %16 = vector.extract_strided_slice %7 {offsets = [0, 64], sizes = [8, 64], strides = [1, 1]} : vector<8x256xf32> to vector<8x64xf32>
    %cst_8 = arith.constant 5.000000e-01 : f32
    %17 = vector.broadcast %cst_8 : f32 to vector<8x64xf32>
    %18 = arith.mulf %17, %16 : vector<8x64xf32>
    %19 = math.tanh %18 : vector<8x64xf32>
    %cst_9 = arith.constant 5.000000e-01 : f32
    %20 = vector.broadcast %cst_9 : f32 to vector<8x64xf32>
    %21 = arith.mulf %20, %19 : vector<8x64xf32>
    %cst_10 = arith.constant 5.000000e-01 : f32
    %22 = vector.broadcast %cst_10 : f32 to vector<8x64xf32>
    %23 = arith.addf %21, %22 : vector<8x64xf32>
    %24 = vector.extract_strided_slice %7 {offsets = [0, 128], sizes = [8, 64], strides = [1, 1]} : vector<8x256xf32> to vector<8x64xf32>
    %25 = math.tanh %24 : vector<8x64xf32>
    %26 = vector.extract_strided_slice %7 {offsets = [0, 192], sizes = [8, 64], strides = [1, 1]} : vector<8x256xf32> to vector<8x64xf32>
    %cst_11 = arith.constant 5.000000e-01 : f32
    %27 = vector.broadcast %cst_11 : f32 to vector<8x64xf32>
    %28 = arith.mulf %27, %26 : vector<8x64xf32>
    %29 = math.tanh %28 : vector<8x64xf32>
    %cst_12 = arith.constant 5.000000e-01 : f32
    %30 = vector.broadcast %cst_12 : f32 to vector<8x64xf32>
    %31 = arith.mulf %30, %29 : vector<8x64xf32>
    %cst_13 = arith.constant 5.000000e-01 : f32
    %32 = vector.broadcast %cst_13 : f32 to vector<8x64xf32>
    %33 = arith.addf %31, %32 : vector<8x64xf32>
    %34 = arith.mulf %23, %2 : vector<8x64xf32>
    %35 = arith.mulf %15, %25 : vector<8x64xf32>
    %36 = arith.addf %34, %35 : vector<8x64xf32>
    %37 = math.tanh %36 : vector<8x64xf32>
    %38 = arith.mulf %33, %37 : vector<8x64xf32>
    %c8_i32 = arith.constant 8 : i32
    %39 = arith.muli %c0_i32, %c8_i32 : i32
    %40 = tpu.assume_multiple %39, 8 : i32
    %c7_i32 = arith.constant 7 : i32
    %41 = arith.subi %c7_i32, %c0_i32 : i32
    %c8_i32_14 = arith.constant 8 : i32
    %42 = arith.muli %41, %c8_i32_14 : i32
    %43 = tpu.assume_multiple %42, 8 : i32
    %44 = vector.extract_strided_slice %38 {offsets = [0, 0], sizes = [8, 32], strides = [1, 1]} : vector<8x64xf32> to vector<8x32xf32>
    %45 = arith.index_cast %40 : i32 to index
    %c0_15 = arith.constant 0 : index
    %46 = vector.load %arg6[%45, %c0_15] : memref<64x64xf32, #tpu.memory_space<vmem>>, vector<8x32xf32>
    tpu.vector_store %arg6[%45, %c0_15], %44 {strides = array<i32>} : memref<64x64xf32, #tpu.memory_space<vmem>>, vector<8x32xf32>,
    %47 = vector.extract_strided_slice %38 {offsets = [0, 32], sizes = [8, 32], strides = [1, 1]} : vector<8x64xf32> to vector<8x32xf32>
    %48 = arith.index_cast %43 : i32 to index
    %c32 = arith.constant 32 : index
    %49 = vector.load %arg6[%48, %c32] : memref<64x64xf32, #tpu.memory_space<vmem>>, vector<8x32xf32>
    tpu.vector_store %arg6[%48, %c32], %47 {strides = array<i32>} : memref<64x64xf32, #tpu.memory_space<vmem>>, vector<8x32xf32>,
    %50 = arith.truncf %38 : vector<8x64xf32> to vector<8x64xbf16>
    %c1_i32 = arith.constant 1 : i32
    %51 = arith.index_cast %c1_i32 : i32 to index
    %c0_16 = arith.constant 0 : index
    %c0_17 = arith.constant 0 : index
    %52 = vector.load %arg1[%51, %c0_16, %c0_17] : memref<8x8x256xf32, #tpu.memory_space<vmem>>, vector<1x8x256xf32>
    %53 = vector.shape_cast %52 : vector<1x8x256xf32> to vector<8x256xf32>
    %cst_18 = arith.constant dense<0.000000e+00> : vector<8x256xf32>
    %54 = tpu.matmul %50, %0, %cst_18 {dimension_numbers = #tpu.dot_dimension_numbers<[1], [0], [0], [1], [0, 0, 1, 1], [], []>} : vector<8x64xbf16>, vector<64x256xbf16>, vector<8x256xf32> -> vector<8x256xf32>
    %55 = arith.addf %53, %54 : vector<8x256xf32>
    %56 = vector.extract_strided_slice %55 {offsets = [0, 0], sizes = [8, 64], strides = [1, 1]} : vector<8x256xf32> to vector<8x64xf32>
    %cst_19 = arith.constant 5.000000e-01 : f32
    %57 = vector.broadcast %cst_19 : f32 to vector<8x64xf32>
    %58 = arith.mulf %57, %56 : vector<8x64xf32>
    %59 = math.tanh %58 : vector<8x64xf32>
    %cst_20 = arith.constant 5.000000e-01 : f32
    %60 = vector.broadcast %cst_20 : f32 to vector<8x64xf32>
    %61 = arith.mulf %60, %59 : vector<8x64xf32>
    %cst_21 = arith.constant 5.000000e-01 : f32
    %62 = vector.broadcast %cst_21 : f32 to vector<8x64xf32>
    %63 = arith.addf %61, %62 : vector<8x64xf32>
    %64 = vector.extract_strided_slice %55 {offsets = [0, 64], sizes = [8, 64], strides = [1, 1]} : vector<8x256xf32> to vector<8x64xf32>
    %cst_22 = arith.constant 5.000000e-01 : f32
    %65 = vector.broadcast %cst_22 : f32 to vector<8x64xf32>
    %66 = arith.mulf %65, %64 : vector<8x64xf32>
    %67 = math.tanh %66 : vector<8x64xf32>
    %cst_23 = arith.constant 5.000000e-01 : f32
    %68 = vector.broadcast %cst_23 : f32 to vector<8x64xf32>
    %69 = arith.mulf %68, %67 : vector<8x64xf32>
    %cst_24 = arith.constant 5.000000e-01 : f32
    %70 = vector.broadcast %cst_24 : f32 to vector<8x64xf32>
    %71 = arith.addf %69, %70 : vector<8x64xf32>
    %72 = vector.extract_strided_slice %55 {offsets = [0, 128], sizes = [8, 64], strides = [1, 1]} : vector<8x256xf32> to vector<8x64xf32>
    %73 = math.tanh %72 : vector<8x64xf32>
    %74 = vector.extract_strided_slice %55 {offsets = [0, 192], sizes = [8, 64], strides = [1, 1]} : vector<8x256xf32> to vector<8x64xf32>
    %cst_25 = arith.constant 5.000000e-01 : f32
    %75 = vector.broadcast %cst_25 : f32 to vector<8x64xf32>
    %76 = arith.mulf %75, %74 : vector<8x64xf32>
    %77 = math.tanh %76 : vector<8x64xf32>
    %cst_26 = arith.constant 5.000000e-01 : f32
    %78 = vector.broadcast %cst_26 : f32 to vector<8x64xf32>
    %79 = arith.mulf %78, %77 : vector<8x64xf32>
    %cst_27 = arith.constant 5.000000e-01 : f32
    %80 = vector.broadcast %cst_27 : f32 to vector<8x64xf32>
    %81 = arith.addf %79, %80 : vector<8x64xf32>
    %82 = arith.mulf %71, %36 : vector<8x64xf32>
    %83 = arith.mulf %63, %73 : vector<8x64xf32>
    %84 = arith.addf %82, %83 : vector<8x64xf32>
    %85 = math.tanh %84 : vector<8x64xf32>
    %86 = arith.mulf %81, %85 : vector<8x64xf32>
    %c8_i32_28 = arith.constant 8 : i32
    %87 = arith.muli %c1_i32, %c8_i32_28 : i32
    %88 = tpu.assume_multiple %87, 8 : i32
    %c7_i32_29 = arith.constant 7 : i32
    %89 = arith.subi %c7_i32_29, %c1_i32 : i32
    %c8_i32_30 = arith.constant 8 : i32
    %90 = arith.muli %89, %c8_i32_30 : i32
    %91 = tpu.assume_multiple %90, 8 : i32
    %92 = vector.extract_strided_slice %86 {offsets = [0, 0], sizes = [8, 32], strides = [1, 1]} : vector<8x64xf32> to vector<8x32xf32>
    %93 = arith.index_cast %88 : i32 to index
    %c0_31 = arith.constant 0 : index
    %94 = vector.load %arg6[%93, %c0_31] : memref<64x64xf32, #tpu.memory_space<vmem>>, vector<8x32xf32>
    tpu.vector_store %arg6[%93, %c0_31], %92 {strides = array<i32>} : memref<64x64xf32, #tpu.memory_space<vmem>>, vector<8x32xf32>,
    %95 = vector.extract_strided_slice %86 {offsets = [0, 32], sizes = [8, 32], strides = [1, 1]} : vector<8x64xf32> to vector<8x32xf32>
    %96 = arith.index_cast %91 : i32 to index
    %c32_32 = arith.constant 32 : index
    %97 = vector.load %arg6[%96, %c32_32] : memref<64x64xf32, #tpu.memory_space<vmem>>, vector<8x32xf32>
    tpu.vector_store %arg6[%96, %c32_32], %95 {strides = array<i32>} : memref<64x64xf32, #tpu.memory_space<vmem>>, vector<8x32xf32>,
    %98 = arith.truncf %86 : vector<8x64xf32> to vector<8x64xbf16>
    %c2_i32 = arith.constant 2 : i32
    %99 = arith.index_cast %c2_i32 : i32 to index
    %c0_33 = arith.constant 0 : index
    %c0_34 = arith.constant 0 : index
    %100 = vector.load %arg1[%99, %c0_33, %c0_34] : memref<8x8x256xf32, #tpu.memory_space<vmem>>, vector<1x8x256xf32>
    %101 = vector.shape_cast %100 : vector<1x8x256xf32> to vector<8x256xf32>
    %cst_35 = arith.constant dense<0.000000e+00> : vector<8x256xf32>
    %102 = tpu.matmul %98, %0, %cst_35 {dimension_numbers = #tpu.dot_dimension_numbers<[1], [0], [0], [1], [0, 0, 1, 1], [], []>} : vector<8x64xbf16>, vector<64x256xbf16>, vector<8x256xf32> -> vector<8x256xf32>
    %103 = arith.addf %101, %102 : vector<8x256xf32>
    %104 = vector.extract_strided_slice %103 {offsets = [0, 0], sizes = [8, 64], strides = [1, 1]} : vector<8x256xf32> to vector<8x64xf32>
    %cst_36 = arith.constant 5.000000e-01 : f32
    %105 = vector.broadcast %cst_36 : f32 to vector<8x64xf32>
    %106 = arith.mulf %105, %104 : vector<8x64xf32>
    %107 = math.tanh %106 : vector<8x64xf32>
    %cst_37 = arith.constant 5.000000e-01 : f32
    %108 = vector.broadcast %cst_37 : f32 to vector<8x64xf32>
    %109 = arith.mulf %108, %107 : vector<8x64xf32>
    %cst_38 = arith.constant 5.000000e-01 : f32
    %110 = vector.broadcast %cst_38 : f32 to vector<8x64xf32>
    %111 = arith.addf %109, %110 : vector<8x64xf32>
    %112 = vector.extract_strided_slice %103 {offsets = [0, 64], sizes = [8, 64], strides = [1, 1]} : vector<8x256xf32> to vector<8x64xf32>
    %cst_39 = arith.constant 5.000000e-01 : f32
    %113 = vector.broadcast %cst_39 : f32 to vector<8x64xf32>
    %114 = arith.mulf %113, %112 : vector<8x64xf32>
    %115 = math.tanh %114 : vector<8x64xf32>
    %cst_40 = arith.constant 5.000000e-01 : f32
    %116 = vector.broadcast %cst_40 : f32 to vector<8x64xf32>
    %117 = arith.mulf %116, %115 : vector<8x64xf32>
    %cst_41 = arith.constant 5.000000e-01 : f32
    %118 = vector.broadcast %cst_41 : f32 to vector<8x64xf32>
    %119 = arith.addf %117, %118 : vector<8x64xf32>
    %120 = vector.extract_strided_slice %103 {offsets = [0, 128], sizes = [8, 64], strides = [1, 1]} : vector<8x256xf32> to vector<8x64xf32>
    %121 = math.tanh %120 : vector<8x64xf32>
    %122 = vector.extract_strided_slice %103 {offsets = [0, 192], sizes = [8, 64], strides = [1, 1]} : vector<8x256xf32> to vector<8x64xf32>
    %cst_42 = arith.constant 5.000000e-01 : f32
    %123 = vector.broadcast %cst_42 : f32 to vector<8x64xf32>
    %124 = arith.mulf %123, %122 : vector<8x64xf32>
    %125 = math.tanh %124 : vector<8x64xf32>
    %cst_43 = arith.constant 5.000000e-01 : f32
    %126 = vector.broadcast %cst_43 : f32 to vector<8x64xf32>
    %127 = arith.mulf %126, %125 : vector<8x64xf32>
    %cst_44 = arith.constant 5.000000e-01 : f32
    %128 = vector.broadcast %cst_44 : f32 to vector<8x64xf32>
    %129 = arith.addf %127, %128 : vector<8x64xf32>
    %130 = arith.mulf %119, %84 : vector<8x64xf32>
    %131 = arith.mulf %111, %121 : vector<8x64xf32>
    %132 = arith.addf %130, %131 : vector<8x64xf32>
    %133 = math.tanh %132 : vector<8x64xf32>
    %134 = arith.mulf %129, %133 : vector<8x64xf32>
    %c8_i32_45 = arith.constant 8 : i32
    %135 = arith.muli %c2_i32, %c8_i32_45 : i32
    %136 = tpu.assume_multiple %135, 8 : i32
    %c7_i32_46 = arith.constant 7 : i32
    %137 = arith.subi %c7_i32_46, %c2_i32 : i32
    %c8_i32_47 = arith.constant 8 : i32
    %138 = arith.muli %137, %c8_i32_47 : i32
    %139 = tpu.assume_multiple %138, 8 : i32
    %140 = vector.extract_strided_slice %134 {offsets = [0, 0], sizes = [8, 32], strides = [1, 1]} : vector<8x64xf32> to vector<8x32xf32>
    %141 = arith.index_cast %136 : i32 to index
    %c0_48 = arith.constant 0 : index
    %142 = vector.load %arg6[%141, %c0_48] : memref<64x64xf32, #tpu.memory_space<vmem>>, vector<8x32xf32>
    tpu.vector_store %arg6[%141, %c0_48], %140 {strides = array<i32>} : memref<64x64xf32, #tpu.memory_space<vmem>>, vector<8x32xf32>,
    %143 = vector.extract_strided_slice %134 {offsets = [0, 32], sizes = [8, 32], strides = [1, 1]} : vector<8x64xf32> to vector<8x32xf32>
    %144 = arith.index_cast %139 : i32 to index
    %c32_49 = arith.constant 32 : index
    %145 = vector.load %arg6[%144, %c32_49] : memref<64x64xf32, #tpu.memory_space<vmem>>, vector<8x32xf32>
    tpu.vector_store %arg6[%144, %c32_49], %143 {strides = array<i32>} : memref<64x64xf32, #tpu.memory_space<vmem>>, vector<8x32xf32>,
    %146 = arith.truncf %134 : vector<8x64xf32> to vector<8x64xbf16>
    %c3_i32 = arith.constant 3 : i32
    %147 = arith.index_cast %c3_i32 : i32 to index
    %c0_50 = arith.constant 0 : index
    %c0_51 = arith.constant 0 : index
    %148 = vector.load %arg1[%147, %c0_50, %c0_51] : memref<8x8x256xf32, #tpu.memory_space<vmem>>, vector<1x8x256xf32>
    %149 = vector.shape_cast %148 : vector<1x8x256xf32> to vector<8x256xf32>
    %cst_52 = arith.constant dense<0.000000e+00> : vector<8x256xf32>
    %150 = tpu.matmul %146, %0, %cst_52 {dimension_numbers = #tpu.dot_dimension_numbers<[1], [0], [0], [1], [0, 0, 1, 1], [], []>} : vector<8x64xbf16>, vector<64x256xbf16>, vector<8x256xf32> -> vector<8x256xf32>
    %151 = arith.addf %149, %150 : vector<8x256xf32>
    %152 = vector.extract_strided_slice %151 {offsets = [0, 0], sizes = [8, 64], strides = [1, 1]} : vector<8x256xf32> to vector<8x64xf32>
    %cst_53 = arith.constant 5.000000e-01 : f32
    %153 = vector.broadcast %cst_53 : f32 to vector<8x64xf32>
    %154 = arith.mulf %153, %152 : vector<8x64xf32>
    %155 = math.tanh %154 : vector<8x64xf32>
    %cst_54 = arith.constant 5.000000e-01 : f32
    %156 = vector.broadcast %cst_54 : f32 to vector<8x64xf32>
    %157 = arith.mulf %156, %155 : vector<8x64xf32>
    %cst_55 = arith.constant 5.000000e-01 : f32
    %158 = vector.broadcast %cst_55 : f32 to vector<8x64xf32>
    %159 = arith.addf %157, %158 : vector<8x64xf32>
    %160 = vector.extract_strided_slice %151 {offsets = [0, 64], sizes = [8, 64], strides = [1, 1]} : vector<8x256xf32> to vector<8x64xf32>
    %cst_56 = arith.constant 5.000000e-01 : f32
    %161 = vector.broadcast %cst_56 : f32 to vector<8x64xf32>
    %162 = arith.mulf %161, %160 : vector<8x64xf32>
    %163 = math.tanh %162 : vector<8x64xf32>
    %cst_57 = arith.constant 5.000000e-01 : f32
    %164 = vector.broadcast %cst_57 : f32 to vector<8x64xf32>
    %165 = arith.mulf %164, %163 : vector<8x64xf32>
    %cst_58 = arith.constant 5.000000e-01 : f32
    %166 = vector.broadcast %cst_58 : f32 to vector<8x64xf32>
    %167 = arith.addf %165, %166 : vector<8x64xf32>
    %168 = vector.extract_strided_slice %151 {offsets = [0, 128], sizes = [8, 64], strides = [1, 1]} : vector<8x256xf32> to vector<8x64xf32>
    %169 = math.tanh %168 : vector<8x64xf32>
    %170 = vector.extract_strided_slice %151 {offsets = [0, 192], sizes = [8, 64], strides = [1, 1]} : vector<8x256xf32> to vector<8x64xf32>
    %cst_59 = arith.constant 5.000000e-01 : f32
    %171 = vector.broadcast %cst_59 : f32 to vector<8x64xf32>
    %172 = arith.mulf %171, %170 : vector<8x64xf32>
    %173 = math.tanh %172 : vector<8x64xf32>
    %cst_60 = arith.constant 5.000000e-01 : f32
    %174 = vector.broadcast %cst_60 : f32 to vector<8x64xf32>
    %175 = arith.mulf %174, %173 : vector<8x64xf32>
    %cst_61 = arith.constant 5.000000e-01 : f32
    %176 = vector.broadcast %cst_61 : f32 to vector<8x64xf32>
    %177 = arith.addf %175, %176 : vector<8x64xf32>
    %178 = arith.mulf %167, %132 : vector<8x64xf32>
    %179 = arith.mulf %159, %169 : vector<8x64xf32>
    %180 = arith.addf %178, %179 : vector<8x64xf32>
    %181 = math.tanh %180 : vector<8x64xf32>
    %182 = arith.mulf %177, %181 : vector<8x64xf32>
    %c8_i32_62 = arith.constant 8 : i32
    %183 = arith.muli %c3_i32, %c8_i32_62 : i32
    %184 = tpu.assume_multiple %183, 8 : i32
    %c7_i32_63 = arith.constant 7 : i32
    %185 = arith.subi %c7_i32_63, %c3_i32 : i32
    %c8_i32_64 = arith.constant 8 : i32
    %186 = arith.muli %185, %c8_i32_64 : i32
    %187 = tpu.assume_multiple %186, 8 : i32
    %188 = vector.extract_strided_slice %182 {offsets = [0, 0], sizes = [8, 32], strides = [1, 1]} : vector<8x64xf32> to vector<8x32xf32>
    %189 = arith.index_cast %184 : i32 to index
    %c0_65 = arith.constant 0 : index
    %190 = vector.load %arg6[%189, %c0_65] : memref<64x64xf32, #tpu.memory_space<vmem>>, vector<8x32xf32>
    tpu.vector_store %arg6[%189, %c0_65], %188 {strides = array<i32>} : memref<64x64xf32, #tpu.memory_space<vmem>>, vector<8x32xf32>,
    %191 = vector.extract_strided_slice %182 {offsets = [0, 32], sizes = [8, 32], strides = [1, 1]} : vector<8x64xf32> to vector<8x32xf32>
    %192 = arith.index_cast %187 : i32 to index
    %c32_66 = arith.constant 32 : index
    %193 = vector.load %arg6[%192, %c32_66] : memref<64x64xf32, #tpu.memory_space<vmem>>, vector<8x32xf32>
    tpu.vector_store %arg6[%192, %c32_66], %191 {strides = array<i32>} : memref<64x64xf32, #tpu.memory_space<vmem>>, vector<8x32xf32>,
    %194 = arith.truncf %182 : vector<8x64xf32> to vector<8x64xbf16>
    %c4_i32 = arith.constant 4 : i32
    %195 = arith.index_cast %c4_i32 : i32 to index
    %c0_67 = arith.constant 0 : index
    %c0_68 = arith.constant 0 : index
    %196 = vector.load %arg1[%195, %c0_67, %c0_68] : memref<8x8x256xf32, #tpu.memory_space<vmem>>, vector<1x8x256xf32>
    %197 = vector.shape_cast %196 : vector<1x8x256xf32> to vector<8x256xf32>
    %cst_69 = arith.constant dense<0.000000e+00> : vector<8x256xf32>
    %198 = tpu.matmul %194, %0, %cst_69 {dimension_numbers = #tpu.dot_dimension_numbers<[1], [0], [0], [1], [0, 0, 1, 1], [], []>} : vector<8x64xbf16>, vector<64x256xbf16>, vector<8x256xf32> -> vector<8x256xf32>
    %199 = arith.addf %197, %198 : vector<8x256xf32>
    %200 = vector.extract_strided_slice %199 {offsets = [0, 0], sizes = [8, 64], strides = [1, 1]} : vector<8x256xf32> to vector<8x64xf32>
    %cst_70 = arith.constant 5.000000e-01 : f32
    %201 = vector.broadcast %cst_70 : f32 to vector<8x64xf32>
    %202 = arith.mulf %201, %200 : vector<8x64xf32>
    %203 = math.tanh %202 : vector<8x64xf32>
    %cst_71 = arith.constant 5.000000e-01 : f32
    %204 = vector.broadcast %cst_71 : f32 to vector<8x64xf32>
    %205 = arith.mulf %204, %203 : vector<8x64xf32>
    %cst_72 = arith.constant 5.000000e-01 : f32
    %206 = vector.broadcast %cst_72 : f32 to vector<8x64xf32>
    %207 = arith.addf %205, %206 : vector<8x64xf32>
    %208 = vector.extract_strided_slice %199 {offsets = [0, 64], sizes = [8, 64], strides = [1, 1]} : vector<8x256xf32> to vector<8x64xf32>
    %cst_73 = arith.constant 5.000000e-01 : f32
    %209 = vector.broadcast %cst_73 : f32 to vector<8x64xf32>
    %210 = arith.mulf %209, %208 : vector<8x64xf32>
    %211 = math.tanh %210 : vector<8x64xf32>
    %cst_74 = arith.constant 5.000000e-01 : f32
    %212 = vector.broadcast %cst_74 : f32 to vector<8x64xf32>
    %213 = arith.mulf %212, %211 : vector<8x64xf32>
    %cst_75 = arith.constant 5.000000e-01 : f32
    %214 = vector.broadcast %cst_75 : f32 to vector<8x64xf32>
    %215 = arith.addf %213, %214 : vector<8x64xf32>
    %216 = vector.extract_strided_slice %199 {offsets = [0, 128], sizes = [8, 64], strides = [1, 1]} : vector<8x256xf32> to vector<8x64xf32>
    %217 = math.tanh %216 : vector<8x64xf32>
    %218 = vector.extract_strided_slice %199 {offsets = [0, 192], sizes = [8, 64], strides = [1, 1]} : vector<8x256xf32> to vector<8x64xf32>
    %cst_76 = arith.constant 5.000000e-01 : f32
    %219 = vector.broadcast %cst_76 : f32 to vector<8x64xf32>
    %220 = arith.mulf %219, %218 : vector<8x64xf32>
    %221 = math.tanh %220 : vector<8x64xf32>
    %cst_77 = arith.constant 5.000000e-01 : f32
    %222 = vector.broadcast %cst_77 : f32 to vector<8x64xf32>
    %223 = arith.mulf %222, %221 : vector<8x64xf32>
    %cst_78 = arith.constant 5.000000e-01 : f32
    %224 = vector.broadcast %cst_78 : f32 to vector<8x64xf32>
    %225 = arith.addf %223, %224 : vector<8x64xf32>
    %226 = arith.mulf %215, %180 : vector<8x64xf32>
    %227 = arith.mulf %207, %217 : vector<8x64xf32>
    %228 = arith.addf %226, %227 : vector<8x64xf32>
    %229 = math.tanh %228 : vector<8x64xf32>
    %230 = arith.mulf %225, %229 : vector<8x64xf32>
    %c8_i32_79 = arith.constant 8 : i32
    %231 = arith.muli %c4_i32, %c8_i32_79 : i32
    %232 = tpu.assume_multiple %231, 8 : i32
    %c7_i32_80 = arith.constant 7 : i32
    %233 = arith.subi %c7_i32_80, %c4_i32 : i32
    %c8_i32_81 = arith.constant 8 : i32
    %234 = arith.muli %233, %c8_i32_81 : i32
    %235 = tpu.assume_multiple %234, 8 : i32
    %236 = vector.extract_strided_slice %230 {offsets = [0, 0], sizes = [8, 32], strides = [1, 1]} : vector<8x64xf32> to vector<8x32xf32>
    %237 = arith.index_cast %232 : i32 to index
    %c0_82 = arith.constant 0 : index
    %238 = vector.load %arg6[%237, %c0_82] : memref<64x64xf32, #tpu.memory_space<vmem>>, vector<8x32xf32>
    tpu.vector_store %arg6[%237, %c0_82], %236 {strides = array<i32>} : memref<64x64xf32, #tpu.memory_space<vmem>>, vector<8x32xf32>,
    %239 = vector.extract_strided_slice %230 {offsets = [0, 32], sizes = [8, 32], strides = [1, 1]} : vector<8x64xf32> to vector<8x32xf32>
    %240 = arith.index_cast %235 : i32 to index
    %c32_83 = arith.constant 32 : index
    %241 = vector.load %arg6[%240, %c32_83] : memref<64x64xf32, #tpu.memory_space<vmem>>, vector<8x32xf32>
    tpu.vector_store %arg6[%240, %c32_83], %239 {strides = array<i32>} : memref<64x64xf32, #tpu.memory_space<vmem>>, vector<8x32xf32>,
    %242 = arith.truncf %230 : vector<8x64xf32> to vector<8x64xbf16>
    %c5_i32 = arith.constant 5 : i32
    %243 = arith.index_cast %c5_i32 : i32 to index
    %c0_84 = arith.constant 0 : index
    %c0_85 = arith.constant 0 : index
    %244 = vector.load %arg1[%243, %c0_84, %c0_85] : memref<8x8x256xf32, #tpu.memory_space<vmem>>, vector<1x8x256xf32>
    %245 = vector.shape_cast %244 : vector<1x8x256xf32> to vector<8x256xf32>
    %cst_86 = arith.constant dense<0.000000e+00> : vector<8x256xf32>
    %246 = tpu.matmul %242, %0, %cst_86 {dimension_numbers = #tpu.dot_dimension_numbers<[1], [0], [0], [1], [0, 0, 1, 1], [], []>} : vector<8x64xbf16>, vector<64x256xbf16>, vector<8x256xf32> -> vector<8x256xf32>
    %247 = arith.addf %245, %246 : vector<8x256xf32>
    %248 = vector.extract_strided_slice %247 {offsets = [0, 0], sizes = [8, 64], strides = [1, 1]} : vector<8x256xf32> to vector<8x64xf32>
    %cst_87 = arith.constant 5.000000e-01 : f32
    %249 = vector.broadcast %cst_87 : f32 to vector<8x64xf32>
    %250 = arith.mulf %249, %248 : vector<8x64xf32>
    %251 = math.tanh %250 : vector<8x64xf32>
    %cst_88 = arith.constant 5.000000e-01 : f32
    %252 = vector.broadcast %cst_88 : f32 to vector<8x64xf32>
    %253 = arith.mulf %252, %251 : vector<8x64xf32>
    %cst_89 = arith.constant 5.000000e-01 : f32
    %254 = vector.broadcast %cst_89 : f32 to vector<8x64xf32>
    %255 = arith.addf %253, %254 : vector<8x64xf32>
    %256 = vector.extract_strided_slice %247 {offsets = [0, 64], sizes = [8, 64], strides = [1, 1]} : vector<8x256xf32> to vector<8x64xf32>
    %cst_90 = arith.constant 5.000000e-01 : f32
    %257 = vector.broadcast %cst_90 : f32 to vector<8x64xf32>
    %258 = arith.mulf %257, %256 : vector<8x64xf32>
    %259 = math.tanh %258 : vector<8x64xf32>
    %cst_91 = arith.constant 5.000000e-01 : f32
    %260 = vector.broadcast %cst_91 : f32 to vector<8x64xf32>
    %261 = arith.mulf %260, %259 : vector<8x64xf32>
    %cst_92 = arith.constant 5.000000e-01 : f32
    %262 = vector.broadcast %cst_92 : f32 to vector<8x64xf32>
    %263 = arith.addf %261, %262 : vector<8x64xf32>
    %264 = vector.extract_strided_slice %247 {offsets = [0, 128], sizes = [8, 64], strides = [1, 1]} : vector<8x256xf32> to vector<8x64xf32>
    %265 = math.tanh %264 : vector<8x64xf32>
    %266 = vector.extract_strided_slice %247 {offsets = [0, 192], sizes = [8, 64], strides = [1, 1]} : vector<8x256xf32> to vector<8x64xf32>
    %cst_93 = arith.constant 5.000000e-01 : f32
    %267 = vector.broadcast %cst_93 : f32 to vector<8x64xf32>
    %268 = arith.mulf %267, %266 : vector<8x64xf32>
    %269 = math.tanh %268 : vector<8x64xf32>
    %cst_94 = arith.constant 5.000000e-01 : f32
    %270 = vector.broadcast %cst_94 : f32 to vector<8x64xf32>
    %271 = arith.mulf %270, %269 : vector<8x64xf32>
    %cst_95 = arith.constant 5.000000e-01 : f32
    %272 = vector.broadcast %cst_95 : f32 to vector<8x64xf32>
    %273 = arith.addf %271, %272 : vector<8x64xf32>
    %274 = arith.mulf %263, %228 : vector<8x64xf32>
    %275 = arith.mulf %255, %265 : vector<8x64xf32>
    %276 = arith.addf %274, %275 : vector<8x64xf32>
    %277 = math.tanh %276 : vector<8x64xf32>
    %278 = arith.mulf %273, %277 : vector<8x64xf32>
    %c8_i32_96 = arith.constant 8 : i32
    %279 = arith.muli %c5_i32, %c8_i32_96 : i32
    %280 = tpu.assume_multiple %279, 8 : i32
    %c7_i32_97 = arith.constant 7 : i32
    %281 = arith.subi %c7_i32_97, %c5_i32 : i32
    %c8_i32_98 = arith.constant 8 : i32
    %282 = arith.muli %281, %c8_i32_98 : i32
    %283 = tpu.assume_multiple %282, 8 : i32
    %284 = vector.extract_strided_slice %278 {offsets = [0, 0], sizes = [8, 32], strides = [1, 1]} : vector<8x64xf32> to vector<8x32xf32>
    %285 = arith.index_cast %280 : i32 to index
    %c0_99 = arith.constant 0 : index
    %286 = vector.load %arg6[%285, %c0_99] : memref<64x64xf32, #tpu.memory_space<vmem>>, vector<8x32xf32>
    tpu.vector_store %arg6[%285, %c0_99], %284 {strides = array<i32>} : memref<64x64xf32, #tpu.memory_space<vmem>>, vector<8x32xf32>,
    %287 = vector.extract_strided_slice %278 {offsets = [0, 32], sizes = [8, 32], strides = [1, 1]} : vector<8x64xf32> to vector<8x32xf32>
    %288 = arith.index_cast %283 : i32 to index
    %c32_100 = arith.constant 32 : index
    %289 = vector.load %arg6[%288, %c32_100] : memref<64x64xf32, #tpu.memory_space<vmem>>, vector<8x32xf32>
    tpu.vector_store %arg6[%288, %c32_100], %287 {strides = array<i32>} : memref<64x64xf32, #tpu.memory_space<vmem>>, vector<8x32xf32>,
    %290 = arith.truncf %278 : vector<8x64xf32> to vector<8x64xbf16>
    %c6_i32 = arith.constant 6 : i32
    %291 = arith.index_cast %c6_i32 : i32 to index
    %c0_101 = arith.constant 0 : index
    %c0_102 = arith.constant 0 : index
    %292 = vector.load %arg1[%291, %c0_101, %c0_102] : memref<8x8x256xf32, #tpu.memory_space<vmem>>, vector<1x8x256xf32>
    %293 = vector.shape_cast %292 : vector<1x8x256xf32> to vector<8x256xf32>
    %cst_103 = arith.constant dense<0.000000e+00> : vector<8x256xf32>
    %294 = tpu.matmul %290, %0, %cst_103 {dimension_numbers = #tpu.dot_dimension_numbers<[1], [0], [0], [1], [0, 0, 1, 1], [], []>} : vector<8x64xbf16>, vector<64x256xbf16>, vector<8x256xf32> -> vector<8x256xf32>
    %295 = arith.addf %293, %294 : vector<8x256xf32>
    %296 = vector.extract_strided_slice %295 {offsets = [0, 0], sizes = [8, 64], strides = [1, 1]} : vector<8x256xf32> to vector<8x64xf32>
    %cst_104 = arith.constant 5.000000e-01 : f32
    %297 = vector.broadcast %cst_104 : f32 to vector<8x64xf32>
    %298 = arith.mulf %297, %296 : vector<8x64xf32>
    %299 = math.tanh %298 : vector<8x64xf32>
    %cst_105 = arith.constant 5.000000e-01 : f32
    %300 = vector.broadcast %cst_105 : f32 to vector<8x64xf32>
    %301 = arith.mulf %300, %299 : vector<8x64xf32>
    %cst_106 = arith.constant 5.000000e-01 : f32
    %302 = vector.broadcast %cst_106 : f32 to vector<8x64xf32>
    %303 = arith.addf %301, %302 : vector<8x64xf32>
    %304 = vector.extract_strided_slice %295 {offsets = [0, 64], sizes = [8, 64], strides = [1, 1]} : vector<8x256xf32> to vector<8x64xf32>
    %cst_107 = arith.constant 5.000000e-01 : f32
    %305 = vector.broadcast %cst_107 : f32 to vector<8x64xf32>
    %306 = arith.mulf %305, %304 : vector<8x64xf32>
    %307 = math.tanh %306 : vector<8x64xf32>
    %cst_108 = arith.constant 5.000000e-01 : f32
    %308 = vector.broadcast %cst_108 : f32 to vector<8x64xf32>
    %309 = arith.mulf %308, %307 : vector<8x64xf32>
    %cst_109 = arith.constant 5.000000e-01 : f32
    %310 = vector.broadcast %cst_109 : f32 to vector<8x64xf32>
    %311 = arith.addf %309, %310 : vector<8x64xf32>
    %312 = vector.extract_strided_slice %295 {offsets = [0, 128], sizes = [8, 64], strides = [1, 1]} : vector<8x256xf32> to vector<8x64xf32>
    %313 = math.tanh %312 : vector<8x64xf32>
    %314 = vector.extract_strided_slice %295 {offsets = [0, 192], sizes = [8, 64], strides = [1, 1]} : vector<8x256xf32> to vector<8x64xf32>
    %cst_110 = arith.constant 5.000000e-01 : f32
    %315 = vector.broadcast %cst_110 : f32 to vector<8x64xf32>
    %316 = arith.mulf %315, %314 : vector<8x64xf32>
    %317 = math.tanh %316 : vector<8x64xf32>
    %cst_111 = arith.constant 5.000000e-01 : f32
    %318 = vector.broadcast %cst_111 : f32 to vector<8x64xf32>
    %319 = arith.mulf %318, %317 : vector<8x64xf32>
    %cst_112 = arith.constant 5.000000e-01 : f32
    %320 = vector.broadcast %cst_112 : f32 to vector<8x64xf32>
    %321 = arith.addf %319, %320 : vector<8x64xf32>
    %322 = arith.mulf %311, %276 : vector<8x64xf32>
    %323 = arith.mulf %303, %313 : vector<8x64xf32>
    %324 = arith.addf %322, %323 : vector<8x64xf32>
    %325 = math.tanh %324 : vector<8x64xf32>
    %326 = arith.mulf %321, %325 : vector<8x64xf32>
    %c8_i32_113 = arith.constant 8 : i32
    %327 = arith.muli %c6_i32, %c8_i32_113 : i32
    %328 = tpu.assume_multiple %327, 8 : i32
    %c7_i32_114 = arith.constant 7 : i32
    %329 = arith.subi %c7_i32_114, %c6_i32 : i32
    %c8_i32_115 = arith.constant 8 : i32
    %330 = arith.muli %329, %c8_i32_115 : i32
    %331 = tpu.assume_multiple %330, 8 : i32
    %332 = vector.extract_strided_slice %326 {offsets = [0, 0], sizes = [8, 32], strides = [1, 1]} : vector<8x64xf32> to vector<8x32xf32>
    %333 = arith.index_cast %328 : i32 to index
    %c0_116 = arith.constant 0 : index
    %334 = vector.load %arg6[%333, %c0_116] : memref<64x64xf32, #tpu.memory_space<vmem>>, vector<8x32xf32>
    tpu.vector_store %arg6[%333, %c0_116], %332 {strides = array<i32>} : memref<64x64xf32, #tpu.memory_space<vmem>>, vector<8x32xf32>,
    %335 = vector.extract_strided_slice %326 {offsets = [0, 32], sizes = [8, 32], strides = [1, 1]} : vector<8x64xf32> to vector<8x32xf32>
    %336 = arith.index_cast %331 : i32 to index
    %c32_117 = arith.constant 32 : index
    %337 = vector.load %arg6[%336, %c32_117] : memref<64x64xf32, #tpu.memory_space<vmem>>, vector<8x32xf32>
    tpu.vector_store %arg6[%336, %c32_117], %335 {strides = array<i32>} : memref<64x64xf32, #tpu.memory_space<vmem>>, vector<8x32xf32>,
    %338 = arith.truncf %326 : vector<8x64xf32> to vector<8x64xbf16>
    %c7_i32_118 = arith.constant 7 : i32
    %339 = arith.index_cast %c7_i32_118 : i32 to index
    %c0_119 = arith.constant 0 : index
    %c0_120 = arith.constant 0 : index
    %340 = vector.load %arg1[%339, %c0_119, %c0_120] : memref<8x8x256xf32, #tpu.memory_space<vmem>>, vector<1x8x256xf32>
    %341 = vector.shape_cast %340 : vector<1x8x256xf32> to vector<8x256xf32>
    %cst_121 = arith.constant dense<0.000000e+00> : vector<8x256xf32>
    %342 = tpu.matmul %338, %0, %cst_121 {dimension_numbers = #tpu.dot_dimension_numbers<[1], [0], [0], [1], [0, 0, 1, 1], [], []>} : vector<8x64xbf16>, vector<64x256xbf16>, vector<8x256xf32> -> vector<8x256xf32>
    %343 = arith.addf %341, %342 : vector<8x256xf32>
    %344 = vector.extract_strided_slice %343 {offsets = [0, 0], sizes = [8, 64], strides = [1, 1]} : vector<8x256xf32> to vector<8x64xf32>
    %cst_122 = arith.constant 5.000000e-01 : f32
    %345 = vector.broadcast %cst_122 : f32 to vector<8x64xf32>
    %346 = arith.mulf %345, %344 : vector<8x64xf32>
    %347 = math.tanh %346 : vector<8x64xf32>
    %cst_123 = arith.constant 5.000000e-01 : f32
    %348 = vector.broadcast %cst_123 : f32 to vector<8x64xf32>
    %349 = arith.mulf %348, %347 : vector<8x64xf32>
    %cst_124 = arith.constant 5.000000e-01 : f32
    %350 = vector.broadcast %cst_124 : f32 to vector<8x64xf32>
    %351 = arith.addf %349, %350 : vector<8x64xf32>
    %352 = vector.extract_strided_slice %343 {offsets = [0, 64], sizes = [8, 64], strides = [1, 1]} : vector<8x256xf32> to vector<8x64xf32>
    %cst_125 = arith.constant 5.000000e-01 : f32
    %353 = vector.broadcast %cst_125 : f32 to vector<8x64xf32>
    %354 = arith.mulf %353, %352 : vector<8x64xf32>
    %355 = math.tanh %354 : vector<8x64xf32>
    %cst_126 = arith.constant 5.000000e-01 : f32
    %356 = vector.broadcast %cst_126 : f32 to vector<8x64xf32>
    %357 = arith.mulf %356, %355 : vector<8x64xf32>
    %cst_127 = arith.constant 5.000000e-01 : f32
    %358 = vector.broadcast %cst_127 : f32 to vector<8x64xf32>
    %359 = arith.addf %357, %358 : vector<8x64xf32>
    %360 = vector.extract_strided_slice %343 {offsets = [0, 128], sizes = [8, 64], strides = [1, 1]} : vector<8x256xf32> to vector<8x64xf32>
    %361 = math.tanh %360 : vector<8x64xf32>
    %362 = vector.extract_strided_slice %343 {offsets = [0, 192], sizes = [8, 64], strides = [1, 1]} : vector<8x256xf32> to vector<8x64xf32>
    %cst_128 = arith.constant 5.000000e-01 : f32
    %363 = vector.broadcast %cst_128 : f32 to vector<8x64xf32>
    %364 = arith.mulf %363, %362 : vector<8x64xf32>
    %365 = math.tanh %364 : vector<8x64xf32>
    %cst_129 = arith.constant 5.000000e-01 : f32
    %366 = vector.broadcast %cst_129 : f32 to vector<8x64xf32>
    %367 = arith.mulf %366, %365 : vector<8x64xf32>
    %cst_130 = arith.constant 5.000000e-01 : f32
    %368 = vector.broadcast %cst_130 : f32 to vector<8x64xf32>
    %369 = arith.addf %367, %368 : vector<8x64xf32>
    %370 = arith.mulf %359, %324 : vector<8x64xf32>
    %371 = arith.mulf %351, %361 : vector<8x64xf32>
    %372 = arith.addf %370, %371 : vector<8x64xf32>
    %373 = math.tanh %372 : vector<8x64xf32>
    %374 = arith.mulf %369, %373 : vector<8x64xf32>
    %c8_i32_131 = arith.constant 8 : i32
    %375 = arith.muli %c7_i32_118, %c8_i32_131 : i32
    %376 = tpu.assume_multiple %375, 8 : i32
    %c7_i32_132 = arith.constant 7 : i32
    %377 = arith.subi %c7_i32_132, %c7_i32_118 : i32
    %c8_i32_133 = arith.constant 8 : i32
    %378 = arith.muli %377, %c8_i32_133 : i32
    %379 = tpu.assume_multiple %378, 8 : i32
    %380 = vector.extract_strided_slice %374 {offsets = [0, 0], sizes = [8, 32], strides = [1, 1]} : vector<8x64xf32> to vector<8x32xf32>
    %381 = arith.index_cast %376 : i32 to index
    %c0_134 = arith.constant 0 : index
    %382 = vector.load %arg6[%381, %c0_134] : memref<64x64xf32, #tpu.memory_space<vmem>>, vector<8x32xf32>
    tpu.vector_store %arg6[%381, %c0_134], %380 {strides = array<i32>} : memref<64x64xf32, #tpu.memory_space<vmem>>, vector<8x32xf32>,
    %383 = vector.extract_strided_slice %374 {offsets = [0, 32], sizes = [8, 32], strides = [1, 1]} : vector<8x64xf32> to vector<8x32xf32>
    %384 = arith.index_cast %379 : i32 to index
    %c32_135 = arith.constant 32 : index
    %385 = vector.load %arg6[%384, %c32_135] : memref<64x64xf32, #tpu.memory_space<vmem>>, vector<8x32xf32>
    tpu.vector_store %arg6[%384, %c32_135], %383 {strides = array<i32>} : memref<64x64xf32, #tpu.memory_space<vmem>>, vector<8x32xf32>,
    %386 = arith.truncf %374 : vector<8x64xf32> to vector<8x64xbf16>
    %c8_i32_136 = arith.constant 8 : i32
    %c0_137 = arith.constant 0 : index
    %c0_138 = arith.constant 0 : index
    %387 = vector.load %arg6[%c0_137, %c0_138] : memref<64x64xf32, #tpu.memory_space<vmem>>, vector<64x64xf32>
    %388 = arith.truncf %387 : vector<64x64xf32> to vector<64x64xbf16>
    %c0_139 = arith.constant 0 : index
    %c0_140 = arith.constant 0 : index
    %389 = vector.load %arg3[%c0_139, %c0_140] : memref<64x32xbf16, #tpu.memory_space<vmem>>, vector<64x32xbf16>
    %cst_141 = arith.constant dense<0.000000e+00> : vector<64x32xf32>
    %390 = tpu.matmul %388, %389, %cst_141 {dimension_numbers = #tpu.dot_dimension_numbers<[1], [0], [0], [1], [0, 0, 1, 1], [], []>} : vector<64x64xbf16>, vector<64x32xbf16>, vector<64x32xf32> -> vector<64x32xf32>
    %c0_142 = arith.constant 0 : index
    %c0_143 = arith.constant 0 : index
    %391 = vector.load %arg4[%c0_142, %c0_143] : memref<1x32xf32, #tpu.memory_space<vmem>>, vector<1x32xf32>
    %392 = vector.broadcast %391 : vector<1x32xf32> to vector<64x32xf32>
    %393 = arith.addf %390, %392 : vector<64x32xf32>
    %394 = vector.shape_cast %393 : vector<64x32xf32> to vector<8x8x32xf32>
    %c0_144 = arith.constant 0 : index
    %c0_145 = arith.constant 0 : index
    %c0_146 = arith.constant 0 : index
    %395 = vector.load %arg5[%c0_144, %c0_145, %c0_146] : memref<8x8x32xf32, #tpu.memory_space<vmem>>, vector<8x8x32xf32>
    tpu.vector_store %arg5[%c0_144, %c0_145, %c0_146], %394 {strides = array<i32>} : memref<8x8x32xf32, #tpu.memory_space<vmem>>, vector<8x8x32xf32>,
    return
  }
  func.func @transform_0(%arg0: i32) -> (i32, i32, i32) {
    %c0_i32 = arith.constant 0 : i32
    %c0_i32_0 = arith.constant 0 : i32
    %c0_i32_1 = arith.constant 0 : i32
    return %c0_i32, %arg0, %c0_i32_0 : i32, i32, i32
  }
  func.func @transform_1(%arg0: i32) -> (i32, i32) {
    %c0_i32 = arith.constant 0 : i32
    %c0_i32_0 = arith.constant 0 : i32
    %c0_i32_1 = arith.constant 0 : i32
    return %c0_i32, %c0_i32_0 : i32, i32
  }
  func.func @transform_2(%arg0: i32) -> (i32, i32) {
    %c0_i32 = arith.constant 0 : i32
    %c0_i32_0 = arith.constant 0 : i32
    %c0_i32_1 = arith.constant 0 : i32
    return %c0_i32, %c0_i32_0 : i32, i32
  }
  func.func @transform_3(%arg0: i32) -> (i32, i32) {
    %c0_i32 = arith.constant 0 : i32
    %c0_i32_0 = arith.constant 0 : i32
    %c0_i32_1 = arith.constant 0 : i32
    return %c0_i32, %c0_i32_0 : i32, i32
  }
  func.func @transform_4(%arg0: i32) -> (i32, i32, i32) {
    %c0_i32 = arith.constant 0 : i32
    %c0_i32_0 = arith.constant 0 : i32
    %c0_i32_1 = arith.constant 0 : i32
    return %c0_i32, %arg0, %c0_i32_0 : i32, i32, i32
  }
}

</mosaic_0001>

<llo_original>
// kernel: tpu_custom_call.1
$region0: #{tpu_custom_call.1}
  #allocation0 [shape = 'u32[]', space=smem, size = 0x4, offset = 0x4, fixed_abs, tag = 'smem constant byte address 0x4 - core index']
  #allocation1 [shape = 'u32[144,128]{1,0:T(1,128)}', space=vmem, size = 0x12000, scoped, tag = 'internal scratch']
  #allocation2 [shape = 'f32[64,64]{1,0:T(8,128)}', space=vmem, size = 0x8000, scoped, tag = 'scratch operand']
  %s0 = inlined_call_operand.hbm [shape: f32[8,8,256], index: 0, kind: input, shape index: {}]
  %s1 = inlined_call_operand.hbm [shape: bf16[64,256], index: 1, kind: input, shape index: {}]
  %s2 = inlined_call_operand.vmem [shape: bf16[64,32], index: 2, kind: input, shape index: {}]
  %s3 = inlined_call_operand.vmem [shape: f32[1,32], index: 3, kind: input, shape index: {}]
  %s4 = inlined_call_operand.hbm [shape: f32[8,8,32], index: 4, kind: output, shape index: {}]
  %s5 = sld [smem:[#allocation0]]
  $region34: #{tpu_custom_call.1} parent=0
    _
  %s7 = ssub.s32 1, %s5
  %s8 = scalar_select 0, %s7, %s5
  $region1: #{tpu_custom_call.1} parent=0
    #allocation3 [shape = 'u8[65536]{0}', space=vmem, size = 0x10000, scoped, tag = 'input window, operand 0, single buffered']
    #allocation4 [shape = 's32[1]{0}', space=sflag, size = 0x4, scoped, tag = 'scoped memory for tpu_custom_call.1']
    #allocation5 [shape = 's32[1]{0}', space=sflag, size = 0x4, scoped, tag = 'scoped memory for tpu_custom_call.1']
    #allocation6 [shape = 'u8[32768]{0}', space=vmem, size = 0x8000, scoped, tag = 'input window, operand 1, single buffered']
    #allocation7 [shape = 's32[1]{0}', space=sflag, size = 0x4, scoped, tag = 'scoped memory for tpu_custom_call.1']
    #allocation8 [shape = 'u8[32768]{0}', space=vmem, size = 0x8000, scoped, tag = 'output window, operand 0, single buffered']
    %9 = vsyncpa [#allocation4], 0
    %10 = vsyncpa [#allocation7], 0
    %11 = vsyncpa [#allocation5], 0
    // Predicated region
    $region2: #{tpu_custom_call.1} parent=1 // pred_check
      _
    $region3: #{tpu_custom_call.1} parent=1 // pred_check_branch
      %13 = sbr.rel (0) target = $region5
    $region4: #{tpu_custom_call.1} parent=1 // pred_region
      %s15 = ssub.s32 2048, 2048
      %16 = vsyncadd [#allocation4], %s15
      %s17 = sshll.u32 [#allocation3], 4
      %s18 = int_to_ptr.vmem [resolvable:$true] %s17
      %23 = dma.hbm_to_vmem [thread:$0]  %s0, 2048, %s18, [#allocation4], 256, 256, 16
    $region5: #{tpu_custom_call.1} parent=1 // pred_fallthru
      _
    // Predicated region
    $region6: #{tpu_custom_call.1} parent=1 // pred_check
      _
    $region7: #{tpu_custom_call.1} parent=1 // pred_check_branch
      %25 = sbr.rel (0) target = $region9
    $region8: #{tpu_custom_call.1} parent=1 // pred_region
      %s27 = ssub.s32 1024, 1024
      %28 = vsyncadd [#allocation7], %s27
      %s29 = sshll.u32 [#allocation6], 4
      %s30 = int_to_ptr.vmem [resolvable:$true] %s29
      %35 = dma.hbm_to_vmem [thread:$0]  %s1, 1024, %s30, [#allocation7], 128, 128, 8
    $region9: #{tpu_custom_call.1} parent=1 // pred_fallthru
      _
    // Predicated region
    $region10: #{tpu_custom_call.1} parent=1 // pred_check
      _
    $region11: #{tpu_custom_call.1} parent=1 // pred_check_branch
      %37 = sbr.rel (0) target = $region13
    $region12: #{tpu_custom_call.1} parent=1 // pred_region
      _
    $region13: #{tpu_custom_call.1} parent=1 // pred_fallthru
      _
    // Predicated region
    $region14: #{tpu_custom_call.1} parent=1 // pred_check
      _
    $region15: #{tpu_custom_call.1} parent=1 // pred_check_branch
      %39 = sbr.rel (0) target = $region17
    $region16: #{tpu_custom_call.1} parent=1 // pred_region
      _
    $region17: #{tpu_custom_call.1} parent=1 // pred_fallthru
      _
    // Predicated region
    $region18: #{tpu_custom_call.1} parent=1 // pred_check
      _
    $region19: #{tpu_custom_call.1} parent=1 // pred_check_branch
      %41 = sbr.rel (0) target = $region21
    $region20: #{tpu_custom_call.1} parent=1 // pred_region
      %42 = dma.done [#allocation4], 2048
    $region21: #{tpu_custom_call.1} parent=1 // pred_fallthru
      _
    // Predicated region
    $region22: #{tpu_custom_call.1} parent=1 // pred_check
      _
    $region23: #{tpu_custom_call.1} parent=1 // pred_check_branch
      %44 = sbr.rel (0) target = $region25
    $region24: #{tpu_custom_call.1} parent=1 // pred_region
      %45 = dma.done [#allocation7], 1024
    $region25: #{tpu_custom_call.1} parent=1 // pred_fallthru
      _
    %v47 = vld [vmem:[#allocation6] sm:$0xff]
    %v48 = vld [vmem:[#allocation6 + $0x8] sm:$0xff]
    %v49 = vld [vmem:[#allocation6 + $0x10] sm:$0xff]
    %v50 = vld [vmem:[#allocation6 + $0x18] sm:$0xff]
    %v51 = vld [vmem:[#allocation6 + $0x20] sm:$0xff]
    %v52 = vld [vmem:[#allocation6 + $0x28] sm:$0xff]
    %v53 = vld [vmem:[#allocation6 + $0x30] sm:$0xff]
    %v54 = vld [vmem:[#allocation6 + $0x38] sm:$0xff]
    %v55 = vld [vmem:[#allocation3] sm:$0xff]
    %v56 = vld [vmem:[#allocation3 + $0x8] sm:$0xff]
    %v65 = vunpack.c.l.b16 %v47
    %v66 = vunpack.c.h.b16 %v47
    %v67 = vunpack.c.l.b16 %v48
    %v68 = vunpack.c.h.b16 %v48
    %v69 = vunpack.c.l.b16 %v49
    %v70 = vunpack.c.h.b16 %v49
    %v71 = vunpack.c.l.b16 %v50
    %v72 = vunpack.c.h.b16 %v50
    %v73 = vunpack.c.l.b16 %v51
    %v74 = vunpack.c.h.b16 %v51
    %v75 = vunpack.c.l.b16 %v52
    %v76 = vunpack.c.h.b16 %v52
    %v77 = vunpack.c.l.b16 %v53
    %v78 = vunpack.c.h.b16 %v53
    %v79 = vunpack.c.l.b16 %v54
    %v80 = vunpack.c.h.b16 %v54
    %v81 = vpack.c.b16 %v67, %v65
    %v82 = vpack.c.b16 %v68, %v66
    %v83 = vpack.c.b16 %v71, %v69
    %v84 = vpack.c.b16 %v72, %v70
    %v85 = vpack.c.b16 %v75, %v73
    %v86 = vpack.c.b16 %v76, %v74
    %v87 = vpack.c.b16 %v79, %v77
    %v88 = vpack.c.b16 %v80, %v78
    %vm97 = vcmask 523264
    %v99 = vsel %vm97, 0, 0
    %101 = vmatprep.subr.bf16.mxu0 %v82
    %102 = vmatpush1.bf16.msra.mxu0 %v81
    %103 = vmatprep.subr.bf16.mxu0 %v84
    %104 = vmatpush1.bf16.msra.mxu0 %v83
    %105 = vmatprep.subr.bf16.mxu0 %v86
    %106 = vmatpush1.bf16.msra.mxu0 %v85
    %107 = vmatprep.subr.bf16.mxu0 %v88
    %108 = vmatpush1.bf16.msra.mxu0 %v87
    %109 = vmatprep.subr.bf16.mxu0 0
    %110 = vmatpush1.bf16.msra.mxu0 0
    %111 = vmatprep.subr.bf16.mxu0 0
    %112 = vmatpush1.bf16.msra.mxu0 0
    %113 = vmatprep.subr.bf16.mxu0 0
    %114 = vmatpush1.bf16.msra.mxu0 0
    %115 = vmatprep.subr.bf16.mxu0 0
    %116 = vmatpush1.bf16.msra.mxu0 0
    %117 = vmatprep.subr.bf16.mxu0 0
    %118 = vmatpush1.bf16.msra.mxu0 0
    %119 = vmatprep.subr.bf16.mxu0 0
    %120 = vmatpush1.bf16.msra.mxu0 0
    %121 = vmatprep.subr.bf16.mxu0 0
    %122 = vmatpush1.bf16.msra.mxu0 0
    %123 = vmatprep.subr.bf16.mxu0 0
    %124 = vmatpush1.bf16.msra.mxu0 0
    %125 = vmatprep.subr.bf16.mxu0 0
    %126 = vmatpush1.bf16.msra.mxu0 0
    %127 = vmatprep.subr.bf16.mxu0 0
    %128 = vmatpush1.bf16.msra.mxu0 0
    %129 = vmatprep.subr.bf16.mxu0 0
    %130 = vmatpush1.bf16.msra.mxu0 0
    %131 = vmatprep.subr.bf16.mxu0 0
    %132 = vmatpush1.bf16.msra.mxu0 0
    %133 = vmatprep.mubr.bf16.mxu0 0
    %134 = vmatmul.mubr.bf16.gmra.mrb[0].mxu0 %v99
    %v135 = vpop.f32.mrb[0].mxu0
    %v136 = vadd.f32 0.0, %v135
    %v137 = vpop.f32.mrb[0].mxu0
    %v138 = vadd.f32 0.0, %v137
    %v139 = vpop.f32.mrb[0].mxu0
    %v140 = vpop.f32.mrb[0].mxu0
    %141 = vdwg.mxu0
    %v142 = vadd.f32 %v55, %v136
    %v143 = vadd.f32 %v56, %v138
    %v144 = vmul.f32 %v142, 0.5
    %v145 = vtanh.pop %v144
    %v146 = vmul.f32 %v145, 0.5
    %v147 = vadd.f32 %v146, 0.5
    %v148 = vtanh.pop %v143
    %v149 = vmul.f32 %v143, 0.5
    %v150 = vtanh.pop %v149
    %v151 = vmul.f32 %v150, 0.5
    %v152 = vadd.f32 %v151, 0.5
    %v153 = vmul.f32 %v147, 0.0
    %v154 = vmul.f32 %v147, %v148
    %156 = vrot.lane.b32.xlu0 %v154, 64
    %v157 = vpop.permute.xlu0 %156
    %v159 = vadd.f32 %v153, %v157
    %v160 = vtanh.pop %v159
    %v161 = vmul.f32 %v152, %v160
    %163 = vrot.lane.b32.xlu0 %v161, 64
    %v164 = vpop.permute.xlu0 %163
    %vm166 = vcmask 261120
    %167 = vst.msk [vmem:[#allocation2] sm:$0xff] %vm166, %v164
    %s168 = scalar_lea.vmem [#allocation2], 56
    %vm169 = vcmask 523520
    %170 = vst.msk [vmem:[%s168] sm:$0xff] %vm169, %v164
    %v171 = vpack.c.bf16 %v161, %v161
    %s172 = scalar_lea.vmem [#allocation3], 16
    %v173 = vld [vmem:[%s172] sm:$0xff]
    %v174 = vld [vmem:[%s172 + $0x8] sm:$0xff]
    %176 = vrot.lane.b32.xlu0 %v171, 64
    %v177 = vpop.permute.xlu0 %176
    %v179 = vsel %vm97, %v177, 0
    %181 = vmatprep.subr.bf16.mxu0 %v82
    %182 = vmatpush1.bf16.msra.mxu0 %v81
    %183 = vmatprep.subr.bf16.mxu0 %v84
    %184 = vmatpush1.bf16.msra.mxu0 %v83
    %185 = vmatprep.subr.bf16.mxu0 %v86
    %186 = vmatpush1.bf16.msra.mxu0 %v85
    %187 = vmatprep.subr.bf16.mxu0 %v88
    %188 = vmatpush1.bf16.msra.mxu0 %v87
    %189 = vmatprep.subr.bf16.mxu0 0
    %190 = vmatpush1.bf16.msra.mxu0 0
    %191 = vmatprep.subr.bf16.mxu0 0
    %192 = vmatpush1.bf16.msra.mxu0 0
    %193 = vmatprep.subr.bf16.mxu0 0
    %194 = vmatpush1.bf16.msra.mxu0 0
    %195 = vmatprep.subr.bf16.mxu0 0
    %196 = vmatpush1.bf16.msra.mxu0 0
    %197 = vmatprep.subr.bf16.mxu0 0
    %198 = vmatpush1.bf16.msra.mxu0 0
    %199 = vmatprep.subr.bf16.mxu0 0
    %200 = vmatpush1.bf16.msra.mxu0 0
    %201 = vmatprep.subr.bf16.mxu0 0
    %202 = vmatpush1.bf16.msra.mxu0 0
    %203 = vmatprep.subr.bf16.mxu0 0
    %204 = vmatpush1.bf16.msra.mxu0 0
    %205 = vmatprep.subr.bf16.mxu0 0
    %206 = vmatpush1.bf16.msra.mxu0 0
    %207 = vmatprep.subr.bf16.mxu0 0
    %208 = vmatpush1.bf16.msra.mxu0 0
    %209 = vmatprep.subr.bf16.mxu0 0
    %210 = vmatpush1.bf16.msra.mxu0 0
    %211 = vmatprep.subr.bf16.mxu0 0
    %212 = vmatpush1.bf16.msra.mxu0 0
    %213 = vmatprep.mubr.bf16.mxu0 0
    %214 = vmatmul.mubr.bf16.gmra.mrb[0].mxu0 %v179
    %v215 = vpop.f32.mrb[0].mxu0
    %v216 = vadd.f32 0.0, %v215
    %v217 = vpop.f32.mrb[0].mxu0
    %v218 = vadd.f32 0.0, %v217
    %v219 = vpop.f32.mrb[0].mxu0
    %v220 = vpop.f32.mrb[0].mxu0
    %221 = vdwg.mxu0
    %v222 = vadd.f32 %v173, %v216
    %v223 = vadd.f32 %v174, %v218
    %v224 = vmul.f32 %v222, 0.5
    %v225 = vtanh.pop %v224
    %v226 = vmul.f32 %v225, 0.5
    %v227 = vadd.f32 %v226, 0.5
    %v228 = vtanh.pop %v223
    %v229 = vmul.f32 %v223, 0.5
    %v230 = vtanh.pop %v229
    %v231 = vmul.f32 %v230, 0.5
    %v232 = vadd.f32 %v231, 0.5
    %v233 = vmul.f32 %v227, %v159
    %v234 = vmul.f32 %v227, %v228
    %236 = vrot.lane.b32.xlu0 %v234, 64
    %v237 = vpop.permute.xlu0 %236
    %v239 = vadd.f32 %v233, %v237
    %v240 = vtanh.pop %v239
    %v241 = vmul.f32 %v232, %v240
    %243 = vrot.lane.b32.xlu0 %v241, 64
    %v244 = vpop.permute.xlu0 %243
    %s246 = scalar_lea.vmem [#allocation2], 8
    %247 = vst.msk [vmem:[%s246] sm:$0xff] %vm166, %v244
    %s248 = scalar_lea.vmem [#allocation2], 48
    %249 = vst.msk [vmem:[%s248] sm:$0xff] %vm169, %v244
    %v250 = vpack.c.bf16 %v241, %v241
    %s251 = scalar_lea.vmem [#allocation3], 32
    %v252 = vld [vmem:[%s251] sm:$0xff]
    %v253 = vld [vmem:[%s251 + $0x8] sm:$0xff]
    %255 = vrot.lane.b32.xlu0 %v250, 64
    %v256 = vpop.permute.xlu0 %255
    %v258 = vsel %vm97, %v256, 0
    %260 = vmatprep.subr.bf16.mxu0 %v82
    %261 = vmatpush1.bf16.msra.mxu0 %v81
    %262 = vmatprep.subr.bf16.mxu0 %v84
    %263 = vmatpush1.bf16.msra.mxu0 %v83
    %264 = vmatprep.subr.bf16.mxu0 %v86
    %265 = vmatpush1.bf16.msra.mxu0 %v85
    %266 = vmatprep.subr.bf16.mxu0 %v88
    %267 = vmatpush1.bf16.msra.mxu0 %v87
    %268 = vmatprep.subr.bf16.mxu0 0
    %269 = vmatpush1.bf16.msra.mxu0 0
    %270 = vmatprep.subr.bf16.mxu0 0
    %271 = vmatpush1.bf16.msra.mxu0 0
    %272 = vmatprep.subr.bf16.mxu0 0
    %273 = vmatpush1.bf16.msra.mxu0 0
    %274 = vmatprep.subr.bf16.mxu0 0
    %275 = vmatpush1.bf16.msra.mxu0 0
    %276 = vmatprep.subr.bf16.mxu0 0
    %277 = vmatpush1.bf16.msra.mxu0 0
    %278 = vmatprep.subr.bf16.mxu0 0
    %279 = vmatpush1.bf16.msra.mxu0 0
    %280 = vmatprep.subr.bf16.mxu0 0
    %281 = vmatpush1.bf16.msra.mxu0 0
    %282 = vmatprep.subr.bf16.mxu0 0
    %283 = vmatpush1.bf16.msra.mxu0 0
    %284 = vmatprep.subr.bf16.mxu0 0
    %285 = vmatpush1.bf16.msra.mxu0 0
    %286 = vmatprep.subr.bf16.mxu0 0
    %287 = vmatpush1.bf16.msra.mxu0 0
    %288 = vmatprep.subr.bf16.mxu0 0
    %289 = vmatpush1.bf16.msra.mxu0 0
    %290 = vmatprep.subr.bf16.mxu0 0
    %291 = vmatpush1.bf16.msra.mxu0 0
    %292 = vmatprep.mubr.bf16.mxu0 0
    %293 = vmatmul.mubr.bf16.gmra.mrb[0].mxu0 %v258
    %v294 = vpop.f32.mrb[0].mxu0
    %v295 = vadd.f32 0.0, %v294
    %v296 = vpop.f32.mrb[0].mxu0
    %v297 = vadd.f32 0.0, %v296
    %v298 = vpop.f32.mrb[0].mxu0
    %v299 = vpop.f32.mrb[0].mxu0
    %300 = vdwg.mxu0
    %v301 = vadd.f32 %v252, %v295
    %v302 = vadd.f32 %v253, %v297
    %v303 = vmul.f32 %v301, 0.5
    %v304 = vtanh.pop %v303
    %v305 = vmul.f32 %v304, 0.5
    %v306 = vadd.f32 %v305, 0.5
    %v307 = vtanh.pop %v302
    %v308 = vmul.f32 %v302, 0.5
    %v309 = vtanh.pop %v308
    %v310 = vmul.f32 %v309, 0.5
    %v311 = vadd.f32 %v310, 0.5
    %v312 = vmul.f32 %v306, %v239
    %v313 = vmul.f32 %v306, %v307
    %315 = vrot.lane.b32.xlu0 %v313, 64
    %v316 = vpop.permute.xlu0 %315
    %v318 = vadd.f32 %v312, %v316
    %v319 = vtanh.pop %v318
    %v320 = vmul.f32 %v311, %v319
    %322 = vrot.lane.b32.xlu0 %v320, 64
    %v323 = vpop.permute.xlu0 %322
    %s325 = scalar_lea.vmem [#allocation2], 16
    %326 = vst.msk [vmem:[%s325] sm:$0xff] %vm166, %v323
    %s327 = scalar_lea.vmem [#allocation2], 40
    %328 = vst.msk [vmem:[%s327] sm:$0xff] %vm169, %v323
    %v329 = vpack.c.bf16 %v320, %v320
    %s330 = scalar_lea.vmem [#allocation3], 48
    %v331 = vld [vmem:[%s330] sm:$0xff]
    %v332 = vld [vmem:[%s330 + $0x8] sm:$0xff]
    %334 = vrot.lane.b32.xlu0 %v329, 64
    %v335 = vpop.permute.xlu0 %334
    %v337 = vsel %vm97, %v335, 0
    %339 = vmatprep.subr.bf16.mxu0 %v82
    %340 = vmatpush1.bf16.msra.mxu0 %v81
    %341 = vmatprep.subr.bf16.mxu0 %v84
    %342 = vmatpush1.bf16.msra.mxu0 %v83
    %343 = vmatprep.subr.bf16.mxu0 %v86
    %344 = vmatpush1.bf16.msra.mxu0 %v85
    %345 = vmatprep.subr.bf16.mxu0 %v88
    %346 = vmatpush1.bf16.msra.mxu0 %v87
    %347 = vmatprep.subr.bf16.mxu0 0
    %348 = vmatpush1.bf16.msra.mxu0 0
    %349 = vmatprep.subr.bf16.mxu0 0
    %350 = vmatpush1.bf16.msra.mxu0 0
    %351 = vmatprep.subr.bf16.mxu0 0
    %352 = vmatpush1.bf16.msra.mxu0 0
    %353 = vmatprep.subr.bf16.mxu0 0
    %354 = vmatpush1.bf16.msra.mxu0 0
    %355 = vmatprep.subr.bf16.mxu0 0
    %356 = vmatpush1.bf16.msra.mxu0 0
    %357 = vmatprep.subr.bf16.mxu0 0
    %358 = vmatpush1.bf16.msra.mxu0 0
    %359 = vmatprep.subr.bf16.mxu0 0
    %360 = vmatpush1.bf16.msra.mxu0 0
    %361 = vmatprep.subr.bf16.mxu0 0
    %362 = vmatpush1.bf16.msra.mxu0 0
    %363 = vmatprep.subr.bf16.mxu0 0
    %364 = vmatpush1.bf16.msra.mxu0 0
    %365 = vmatprep.subr.bf16.mxu0 0
    %366 = vmatpush1.bf16.msra.mxu0 0
    %367 = vmatprep.subr.bf16.mxu0 0
    %368 = vmatpush1.bf16.msra.mxu0 0
    %369 = vmatprep.subr.bf16.mxu0 0
    %370 = vmatpush1.bf16.msra.mxu0 0
    %371 = vmatprep.mubr.bf16.mxu0 0
    %372 = vmatmul.mubr.bf16.gmra.mrb[0].mxu0 %v337
    %v373 = vpop.f32.mrb[0].mxu0
    %v374 = vadd.f32 0.0, %v373
    %v375 = vpop.f32.mrb[0].mxu0
    %v376 = vadd.f32 0.0, %v375
    %v377 = vpop.f32.mrb[0].mxu0
    %v378 = vpop.f32.mrb[0].mxu0
    %379 = vdwg.mxu0
    %v380 = vadd.f32 %v331, %v374
    %v381 = vadd.f32 %v332, %v376
    %v382 = vmul.f32 %v380, 0.5
    %v383 = vtanh.pop %v382
    %v384 = vmul.f32 %v383, 0.5
    %v385 = vadd.f32 %v384, 0.5
    %v386 = vtanh.pop %v381
    %v387 = vmul.f32 %v381, 0.5
    %v388 = vtanh.pop %v387
    %v389 = vmul.f32 %v388, 0.5
    %v390 = vadd.f32 %v389, 0.5
    %v391 = vmul.f32 %v385, %v318
    %v392 = vmul.f32 %v385, %v386
    %394 = vrot.lane.b32.xlu0 %v392, 64
    %v395 = vpop.permute.xlu0 %394
    %v397 = vadd.f32 %v391, %v395
    %v398 = vtanh.pop %v397
    %v399 = vmul.f32 %v390, %v398
    %401 = vrot.lane.b32.xlu0 %v399, 64
    %v402 = vpop.permute.xlu0 %401
    %s404 = scalar_lea.vmem [#allocation2], 24
    %405 = vst.msk [vmem:[%s404] sm:$0xff] %vm166, %v402
    %s406 = scalar_lea.vmem [#allocation2], 32
    %407 = vst.msk [vmem:[%s406] sm:$0xff] %vm169, %v402
    %v408 = vpack.c.bf16 %v399, %v399
    %s409 = scalar_lea.vmem [#allocation3], 64
    %v410 = vld [vmem:[%s409] sm:$0xff]
    %v411 = vld [vmem:[%s409 + $0x8] sm:$0xff]
    %413 = vrot.lane.b32.xlu0 %v408, 64
    %v414 = vpop.permute.xlu0 %413
    %v416 = vsel %vm97, %v414, 0
    %418 = vmatprep.subr.bf16.mxu0 %v82
    %419 = vmatpush1.bf16.msra.mxu0 %v81
    %420 = vmatprep.subr.bf16.mxu0 %v84
    %421 = vmatpush1.bf16.msra.mxu0 %v83
    %422 = vmatprep.subr.bf16.mxu0 %v86
    %423 = vmatpush1.bf16.msra.mxu0 %v85
    %424 = vmatprep.subr.bf16.mxu0 %v88
    %425 = vmatpush1.bf16.msra.mxu0 %v87
    %426 = vmatprep.subr.bf16.mxu0 0
    %427 = vmatpush1.bf16.msra.mxu0 0
    %428 = vmatprep.subr.bf16.mxu0 0
    %429 = vmatpush1.bf16.msra.mxu0 0
    %430 = vmatprep.subr.bf16.mxu0 0
    %431 = vmatpush1.bf16.msra.mxu0 0
    %432 = vmatprep.subr.bf16.mxu0 0
    %433 = vmatpush1.bf16.msra.mxu0 0
    %434 = vmatprep.subr.bf16.mxu0 0
    %435 = vmatpush1.bf16.msra.mxu0 0
    %436 = vmatprep.subr.bf16.mxu0 0
    %437 = vmatpush1.bf16.msra.mxu0 0
    %438 = vmatprep.subr.bf16.mxu0 0
    %439 = vmatpush1.bf16.msra.mxu0 0
    %440 = vmatprep.subr.bf16.mxu0 0
    %441 = vmatpush1.bf16.msra.mxu0 0
    %442 = vmatprep.subr.bf16.mxu0 0
    %443 = vmatpush1.bf16.msra.mxu0 0
    %444 = vmatprep.subr.bf16.mxu0 0
    %445 = vmatpush1.bf16.msra.mxu0 0
    %446 = vmatprep.subr.bf16.mxu0 0
    %447 = vmatpush1.bf16.msra.mxu0 0
    %448 = vmatprep.subr.bf16.mxu0 0
    %449 = vmatpush1.bf16.msra.mxu0 0
    %450 = vmatprep.mubr.bf16.mxu0 0
    %451 = vmatmul.mubr.bf16.gmra.mrb[0].mxu0 %v416
    %v452 = vpop.f32.mrb[0].mxu0
    %v453 = vadd.f32 0.0, %v452
    %v454 = vpop.f32.mrb[0].mxu0
    %v455 = vadd.f32 0.0, %v454
    %v456 = vpop.f32.mrb[0].mxu0
    %v457 = vpop.f32.mrb[0].mxu0
    %458 = vdwg.mxu0
    %v459 = vadd.f32 %v410, %v453
    %v460 = vadd.f32 %v411, %v455
    %v461 = vmul.f32 %v459, 0.5
    %v462 = vtanh.pop %v461
    %v463 = vmul.f32 %v462, 0.5
    %v464 = vadd.f32 %v463, 0.5
    %v465 = vtanh.pop %v460
    %v466 = vmul.f32 %v460, 0.5
    %v467 = vtanh.pop %v466
    %v468 = vmul.f32 %v467, 0.5
    %v469 = vadd.f32 %v468, 0.5
    %v470 = vmul.f32 %v464, %v397
    %v471 = vmul.f32 %v464, %v465
    %473 = vrot.lane.b32.xlu0 %v471, 64
    %v474 = vpop.permute.xlu0 %473
    %v476 = vadd.f32 %v470, %v474
    %v477 = vtanh.pop %v476
    %v478 = vmul.f32 %v469, %v477
    %480 = vrot.lane.b32.xlu0 %v478, 64
    %v481 = vpop.permute.xlu0 %480
    %483 = vst.msk [vmem:[%s406] sm:$0xff] %vm166, %v481
    %484 = vst.msk [vmem:[%s404] sm:$0xff] %vm169, %v481
    %v485 = vpack.c.bf16 %v478, %v478
    %s486 = scalar_lea.vmem [#allocation3], 80
    %v487 = vld [vmem:[%s486] sm:$0xff]
    %v488 = vld [vmem:[%s486 + $0x8] sm:$0xff]
    %490 = vrot.lane.b32.xlu0 %v485, 64
    %v491 = vpop.permute.xlu0 %490
    %v493 = vsel %vm97, %v491, 0
    %495 = vmatprep.subr.bf16.mxu0 %v82
    %496 = vmatpush1.bf16.msra.mxu0 %v81
    %497 = vmatprep.subr.bf16.mxu0 %v84
    %498 = vmatpush1.bf16.msra.mxu0 %v83
    %499 = vmatprep.subr.bf16.mxu0 %v86
    %500 = vmatpush1.bf16.msra.mxu0 %v85
    %501 = vmatprep.subr.bf16.mxu0 %v88
    %502 = vmatpush1.bf16.msra.mxu0 %v87
    %503 = vmatprep.subr.bf16.mxu0 0
    %504 = vmatpush1.bf16.msra.mxu0 0
    %505 = vmatprep.subr.bf16.mxu0 0
    %506 = vmatpush1.bf16.msra.mxu0 0
    %507 = vmatprep.subr.bf16.mxu0 0
    %508 = vmatpush1.bf16.msra.mxu0 0
    %509 = vmatprep.subr.bf16.mxu0 0
    %510 = vmatpush1.bf16.msra.mxu0 0
    %511 = vmatprep.subr.bf16.mxu0 0
    %512 = vmatpush1.bf16.msra.mxu0 0
    %513 = vmatprep.subr.bf16.mxu0 0
    %514 = vmatpush1.bf16.msra.mxu0 0
    %515 = vmatprep.subr.bf16.mxu0 0
    %516 = vmatpush1.bf16.msra.mxu0 0
    %517 = vmatprep.subr.bf16.mxu0 0
    %518 = vmatpush1.bf16.msra.mxu0 0
    %519 = vmatprep.subr.bf16.mxu0 0
    %520 = vmatpush1.bf16.msra.mxu0 0
    %521 = vmatprep.subr.bf16.mxu0 0
    %522 = vmatpush1.bf16.msra.mxu0 0
    %523 = vmatprep.subr.bf16.mxu0 0
    %524 = vmatpush1.bf16.msra.mxu0 0
    %525 = vmatprep.subr.bf16.mxu0 0
    %526 = vmatpush1.bf16.msra.mxu0 0
    %527 = vmatprep.mubr.bf16.mxu0 0
    %528 = vmatmul.mubr.bf16.gmra.mrb[0].mxu0 %v493
    %v529 = vpop.f32.mrb[0].mxu0
    %v530 = vadd.f32 0.0, %v529
    %v531 = vpop.f32.mrb[0].mxu0
    %v532 = vadd.f32 0.0, %v531
    %v533 = vpop.f32.mrb[0].mxu0
    %v534 = vpop.f32.mrb[0].mxu0
    %535 = vdwg.mxu0
    %v536 = vadd.f32 %v487, %v530
    %v537 = vadd.f32 %v488, %v532
    %v538 = vmul.f32 %v536, 0.5
    %v539 = vtanh.pop %v538
    %v540 = vmul.f32 %v539, 0.5
    %v541 = vadd.f32 %v540, 0.5
    %v542 = vtanh.pop %v537
    %v543 = vmul.f32 %v537, 0.5
    %v544 = vtanh.pop %v543
    %v545 = vmul.f32 %v544, 0.5
    %v546 = vadd.f32 %v545, 0.5
    %v547 = vmul.f32 %v541, %v476
    %v548 = vmul.f32 %v541, %v542
    %550 = vrot.lane.b32.xlu0 %v548, 64
    %v551 = vpop.permute.xlu0 %550
    %v553 = vadd.f32 %v547, %v551
    %v554 = vtanh.pop %v553
    %v555 = vmul.f32 %v546, %v554
    %557 = vrot.lane.b32.xlu0 %v555, 64
    %v558 = vpop.permute.xlu0 %557
    %560 = vst.msk [vmem:[%s327] sm:$0xff] %vm166, %v558
    %561 = vst.msk [vmem:[%s325] sm:$0xff] %vm169, %v558
    %v562 = vpack.c.bf16 %v555, %v555
    %s563 = scalar_lea.vmem [#allocation3], 96
    %v564 = vld [vmem:[%s563] sm:$0xff]
    %v565 = vld [vmem:[%s563 + $0x8] sm:$0xff]
    %567 = vrot.lane.b32.xlu0 %v562, 64
    %v568 = vpop.permute.xlu0 %567
    %v570 = vsel %vm97, %v568, 0
    %572 = vmatprep.subr.bf16.mxu0 %v82
    %573 = vmatpush1.bf16.msra.mxu0 %v81
    %574 = vmatprep.subr.bf16.mxu0 %v84
    %575 = vmatpush1.bf16.msra.mxu0 %v83
    %576 = vmatprep.subr.bf16.mxu0 %v86
    %577 = vmatpush1.bf16.msra.mxu0 %v85
    %578 = vmatprep.subr.bf16.mxu0 %v88
    %579 = vmatpush1.bf16.msra.mxu0 %v87
    %580 = vmatprep.subr.bf16.mxu0 0
    %581 = vmatpush1.bf16.msra.mxu0 0
    %582 = vmatprep.subr.bf16.mxu0 0
    %583 = vmatpush1.bf16.msra.mxu0 0
    %584 = vmatprep.subr.bf16.mxu0 0
    %585 = vmatpush1.bf16.msra.mxu0 0
    %586 = vmatprep.subr.bf16.mxu0 0
    %587 = vmatpush1.bf16.msra.mxu0 0
    %588 = vmatprep.subr.bf16.mxu0 0
    %589 = vmatpush1.bf16.msra.mxu0 0
    %590 = vmatprep.subr.bf16.mxu0 0
    %591 = vmatpush1.bf16.msra.mxu0 0
    %592 = vmatprep.subr.bf16.mxu0 0
    %593 = vmatpush1.bf16.msra.mxu0 0
    %594 = vmatprep.subr.bf16.mxu0 0
    %595 = vmatpush1.bf16.msra.mxu0 0
    %596 = vmatprep.subr.bf16.mxu0 0
    %597 = vmatpush1.bf16.msra.mxu0 0
    %598 = vmatprep.subr.bf16.mxu0 0
    %599 = vmatpush1.bf16.msra.mxu0 0
    %600 = vmatprep.subr.bf16.mxu0 0
    %601 = vmatpush1.bf16.msra.mxu0 0
    %602 = vmatprep.subr.bf16.mxu0 0
    %603 = vmatpush1.bf16.msra.mxu0 0
    %604 = vmatprep.mubr.bf16.mxu0 0
    %605 = vmatmul.mubr.bf16.gmra.mrb[0].mxu0 %v570
    %v606 = vpop.f32.mrb[0].mxu0
    %v607 = vadd.f32 0.0, %v606
    %v608 = vpop.f32.mrb[0].mxu0
    %v609 = vadd.f32 0.0, %v608
    %v610 = vpop.f32.mrb[0].mxu0
    %v611 = vpop.f32.mrb[0].mxu0
    %612 = vdwg.mxu0
    %v613 = vadd.f32 %v564, %v607
    %v614 = vadd.f32 %v565, %v609
    %v615 = vmul.f32 %v613, 0.5
    %v616 = vtanh.pop %v615
    %v617 = vmul.f32 %v616, 0.5
    %v618 = vadd.f32 %v617, 0.5
    %v619 = vtanh.pop %v614
    %v620 = vmul.f32 %v614, 0.5
    %v621 = vtanh.pop %v620
    %v622 = vmul.f32 %v621, 0.5
    %v623 = vadd.f32 %v622, 0.5
    %v624 = vmul.f32 %v618, %v553
    %v625 = vmul.f32 %v618, %v619
    %627 = vrot.lane.b32.xlu0 %v625, 64
    %v628 = vpop.permute.xlu0 %627
    %v630 = vadd.f32 %v624, %v628
    %v631 = vtanh.pop %v630
    %v632 = vmul.f32 %v623, %v631
    %634 = vrot.lane.b32.xlu0 %v632, 64
    %v635 = vpop.permute.xlu0 %634
    %637 = vst.msk [vmem:[%s248] sm:$0xff] %vm166, %v635
    %638 = vst.msk [vmem:[%s246] sm:$0xff] %vm169, %v635
    %v639 = vpack.c.bf16 %v632, %v632
    %s640 = scalar_lea.vmem [#allocation3], 112
    %v641 = vld [vmem:[%s640] sm:$0xff]
    %v642 = vld [vmem:[%s640 + $0x8] sm:$0xff]
    %644 = vrot.lane.b32.xlu0 %v639, 64
    %v645 = vpop.permute.xlu0 %644
    %v647 = vsel %vm97, %v645, 0
    %649 = vmatprep.subr.bf16.mxu0 %v82
    %650 = vmatpush1.bf16.msra.mxu0 %v81
    %651 = vmatprep.subr.bf16.mxu0 %v84
    %652 = vmatpush1.bf16.msra.mxu0 %v83
    %653 = vmatprep.subr.bf16.mxu0 %v86
    %654 = vmatpush1.bf16.msra.mxu0 %v85
    %655 = vmatprep.subr.bf16.mxu0 %v88
    %656 = vmatpush1.bf16.msra.mxu0 %v87
    %657 = vmatprep.subr.bf16.mxu0 0
    %658 = vmatpush1.bf16.msra.mxu0 0
    %659 = vmatprep.subr.bf16.mxu0 0
    %660 = vmatpush1.bf16.msra.mxu0 0
    %661 = vmatprep.subr.bf16.mxu0 0
    %662 = vmatpush1.bf16.msra.mxu0 0
    %663 = vmatprep.subr.bf16.mxu0 0
    %664 = vmatpush1.bf16.msra.mxu0 0
    %665 = vmatprep.subr.bf16.mxu0 0
    %666 = vmatpush1.bf16.msra.mxu0 0
    %667 = vmatprep.subr.bf16.mxu0 0
    %668 = vmatpush1.bf16.msra.mxu0 0
    %669 = vmatprep.subr.bf16.mxu0 0
    %670 = vmatpush1.bf16.msra.mxu0 0
    %671 = vmatprep.subr.bf16.mxu0 0
    %672 = vmatpush1.bf16.msra.mxu0 0
    %673 = vmatprep.subr.bf16.mxu0 0
    %674 = vmatpush1.bf16.msra.mxu0 0
    %675 = vmatprep.subr.bf16.mxu0 0
    %676 = vmatpush1.bf16.msra.mxu0 0
    %677 = vmatprep.subr.bf16.mxu0 0
    %678 = vmatpush1.bf16.msra.mxu0 0
    %679 = vmatprep.subr.bf16.mxu0 0
    %680 = vmatpush1.bf16.msra.mxu0 0
    %681 = vmatprep.mubr.bf16.mxu0 0
    %682 = vmatmul.mubr.bf16.gmra.mrb[0].mxu0 %v647
    %v683 = vpop.f32.mrb[0].mxu0
    %v684 = vadd.f32 0.0, %v683
    %v685 = vpop.f32.mrb[0].mxu0
    %v686 = vadd.f32 0.0, %v685
    %v687 = vpop.f32.mrb[0].mxu0
    %v688 = vpop.f32.mrb[0].mxu0
    %689 = vdwg.mxu0
    %v690 = vadd.f32 %v641, %v684
    %v691 = vadd.f32 %v642, %v686
    %v692 = vmul.f32 %v690, 0.5
    %v693 = vtanh.pop %v692
    %v694 = vmul.f32 %v693, 0.5
    %v695 = vadd.f32 %v694, 0.5
    %v696 = vtanh.pop %v691
    %v697 = vmul.f32 %v691, 0.5
    %v698 = vtanh.pop %v697
    %v699 = vmul.f32 %v698, 0.5
    %v700 = vadd.f32 %v699, 0.5
    %v701 = vmul.f32 %v695, %v630
    %v702 = vmul.f32 %v695, %v696
    %704 = vrot.lane.b32.xlu0 %v702, 64
    %v705 = vpop.permute.xlu0 %704
    %v707 = vadd.f32 %v701, %v705
    %v708 = vtanh.pop %v707
    %v709 = vmul.f32 %v700, %v708
    %711 = vrot.lane.b32.xlu0 %v709, 64
    %v712 = vpop.permute.xlu0 %711
    %714 = vst.msk [vmem:[%s168] sm:$0xff] %vm166, %v712
    %715 = vst.msk [vmem:[#allocation2] sm:$0xff] %vm169, %v712
    %v716 = vld [vmem:[#allocation2] sm:$0xff]
    %v717 = vld [vmem:[#allocation2 + $0x8] sm:$0xff]
    %v718 = vld [vmem:[#allocation2 + $0x10] sm:$0xff]
    %v719 = vld [vmem:[#allocation2 + $0x18] sm:$0xff]
    %v720 = vld [vmem:[#allocation2 + $0x20] sm:$0xff]
    %v721 = vld [vmem:[#allocation2 + $0x28] sm:$0xff]
    %v722 = vld [vmem:[#allocation2 + $0x30] sm:$0xff]
    %v723 = vld [vmem:[#allocation2 + $0x38] sm:$0xff]
    %v724 = vpack.c.bf16 %v717, %v716
    %v725 = vpack.c.bf16 %v719, %v718
    %v726 = vpack.c.bf16 %v721, %v720
    %v727 = vpack.c.bf16 %v723, %v722
    %v728 = vld [vmem:[%s2] sm:$0xf]
    %v729 = vld [vmem:[%s2 + $0x4] sm:$0xf]
    %v730 = vld [vmem:[%s2 + $0x8] sm:$0xf]
    %v731 = vld [vmem:[%s2 + $0xc] sm:$0xf]
    %v732 = vld [vmem:[%s2 + $0x10] sm:$0xf]
    %v733 = vld [vmem:[%s2 + $0x14] sm:$0xf]
    %v734 = vld [vmem:[%s2 + $0x18] sm:$0xf]
    %v735 = vld [vmem:[%s2 + $0x1c] sm:$0xf]
    %v736 = vld [vmem:[%s3] sm:$0x1]
    %v738 = vlaneseq
    %v739 = vshrl.u32 %v738, 7
    %v740 = vsub.s32 0, %v739
    %v741 = vrot.slane %v736, %v740
    %v751 = vunpack.c.l.b16 %v728
    %v752 = vunpack.c.l.b16 %v729
    %v753 = vunpack.c.l.b16 %v730
    %v754 = vunpack.c.l.b16 %v731
    %v755 = vunpack.c.l.b16 %v732
    %v756 = vunpack.c.l.b16 %v733
    %v757 = vunpack.c.l.b16 %v734
    %v758 = vunpack.c.l.b16 %v735
    %v759 = vpack.c.b16 %v752, %v751
    %v760 = vpack.c.b16 %v754, %v753
    %v761 = vpack.c.b16 %v756, %v755
    %v762 = vpack.c.b16 %v758, %v757
    %v768 = vsel %vm97, %v724, 0
    %v771 = vsel %vm97, %v725, 0
    %v774 = vsel %vm97, %v726, 0
    %v777 = vsel %vm97, %v727, 0
    %779 = vmatprep.subr.bf16.mxu0 0
    %780 = vmatpush1.bf16.msra.mxu0 %v759
    %781 = vmatprep.subr.bf16.mxu0 0
    %782 = vmatpush1.bf16.msra.mxu0 %v760
    %783 = vmatprep.subr.bf16.mxu0 0
    %784 = vmatpush1.bf16.msra.mxu0 %v761
    %785 = vmatprep.subr.bf16.mxu0 0
    %786 = vmatpush1.bf16.msra.mxu0 %v762
    %787 = vmatprep.subr.bf16.mxu0 0
    %788 = vmatpush1.bf16.msra.mxu0 0
    %789 = vmatprep.subr.bf16.mxu0 0
    %790 = vmatpush1.bf16.msra.mxu0 0
    %791 = vmatprep.subr.bf16.mxu0 0
    %792 = vmatpush1.bf16.msra.mxu0 0
    %793 = vmatprep.subr.bf16.mxu0 0
    %794 = vmatpush1.bf16.msra.mxu0 0
    %795 = vmatprep.subr.bf16.mxu0 0
    %796 = vmatpush1.bf16.msra.mxu0 0
    %797 = vmatprep.subr.bf16.mxu0 0
    %798 = vmatpush1.bf16.msra.mxu0 0
    %799 = vmatprep.subr.bf16.mxu0 0
    %800 = vmatpush1.bf16.msra.mxu0 0
    %801 = vmatprep.subr.bf16.mxu0 0
    %802 = vmatpush1.bf16.msra.mxu0 0
    %803 = vmatprep.subr.bf16.mxu0 0
    %804 = vmatpush1.bf16.msra.mxu0 0
    %805 = vmatprep.subr.bf16.mxu0 0
    %806 = vmatpush1.bf16.msra.mxu0 0
    %807 = vmatprep.subr.bf16.mxu0 0
    %808 = vmatpush1.bf16.msra.mxu0 0
    %809 = vmatprep.subr.bf16.mxu0 0
    %810 = vmatpush1.bf16.msra.mxu0 0
    %811 = vmatprep.mubr.bf16.mxu0 0
    %812 = vmatmul.mubr.bf16.gmra.mrb[0].mxu0 %v768
    %v813 = vpop.f32.mrb[0].mxu0
    %v814 = vadd.f32 %v741, %v813
    %v815 = vpop.f32.mrb[0].mxu0
    %v816 = vpop.f32.mrb[0].mxu0
    %v817 = vadd.f32 %v741, %v816
    %v818 = vpop.f32.mrb[0].mxu0
    %819 = vmatprep.mubr.bf16.mxu0 0
    %820 = vmatmul.mubr.bf16.gmra.mrb[0].mxu0 %v771
    %v821 = vpop.f32.mrb[0].mxu0
    %v822 = vadd.f32 %v741, %v821
    %v823 = vpop.f32.mrb[0].mxu0
    %v824 = vpop.f32.mrb[0].mxu0
    %v825 = vadd.f32 %v741, %v824
    %v826 = vpop.f32.mrb[0].mxu0
    %827 = vmatprep.mubr.bf16.mxu0 0
    %828 = vmatmul.mubr.bf16.gmra.mrb[0].mxu0 %v774
    %v829 = vpop.f32.mrb[0].mxu0
    %v830 = vadd.f32 %v741, %v829
    %v831 = vpop.f32.mrb[0].mxu0
    %v832 = vpop.f32.mrb[0].mxu0
    %v833 = vadd.f32 %v741, %v832
    %v834 = vpop.f32.mrb[0].mxu0
    %835 = vmatprep.mubr.bf16.mxu0 0
    %836 = vmatmul.mubr.bf16.gmra.mrb[0].mxu0 %v777
    %v837 = vpop.f32.mrb[0].mxu0
    %v838 = vadd.f32 %v741, %v837
    %v839 = vpop.f32.mrb[0].mxu0
    %v840 = vpop.f32.mrb[0].mxu0
    %v841 = vadd.f32 %v741, %v840
    %v842 = vpop.f32.mrb[0].mxu0
    %843 = vdwg.mxu0
    %844 = vst.msk [vmem:[#allocation8] sm:$0xff] %vm166, %v814
    %845 = vst.msk [vmem:[#allocation8 + $0x8] sm:$0xff] %vm166, %v817
    %846 = vst.msk [vmem:[#allocation8 + $0x10] sm:$0xff] %vm166, %v822
    %847 = vst.msk [vmem:[#allocation8 + $0x18] sm:$0xff] %vm166, %v825
    %848 = vst.msk [vmem:[#allocation8 + $0x20] sm:$0xff] %vm166, %v830
    %849 = vst.msk [vmem:[#allocation8 + $0x28] sm:$0xff] %vm166, %v833
    %850 = vst.msk [vmem:[#allocation8 + $0x30] sm:$0xff] %vm166, %v838
    %851 = vst.msk [vmem:[#allocation8 + $0x38] sm:$0xff] %vm166, %v841
    // Predicated region
    $region26: #{tpu_custom_call.1} parent=1 // pred_check
      _
    $region27: #{tpu_custom_call.1} parent=1 // pred_check_branch
      %853 = sbr.rel (0) target = $region29
    $region28: #{tpu_custom_call.1} parent=1 // pred_region
      %s855 = ssub.s32 1024, 1024
      %856 = vsyncadd [#allocation5], %s855
      %s857 = sshll.u32 [#allocation8], 4
      %s858 = int_to_ptr.vmem [resolvable:$true] %s857
      %863 = dma.vmem_to_hbm [thread:$0]  %s858, 1024, %s4, [#allocation5], 128, 128, 8
    $region29: #{tpu_custom_call.1} parent=1 // pred_fallthru
      _
    // Predicated region
    $region30: #{tpu_custom_call.1} parent=1 // pred_check
      _
    $region31: #{tpu_custom_call.1} parent=1 // pred_check_branch
      %865 = sbr.rel (0) target = $region33
    $region32: #{tpu_custom_call.1} parent=1 // pred_region
      %866 = dma.done [#allocation5], 1024
    $region33: #{tpu_custom_call.1} parent=1 // pred_fallthru
      _
    %867 = vsyncpa [#allocation4], 1
    %868 = vsyncpa [#allocation7], 1
    %869 = vsyncpa [#allocation5], 1

</llo_original>
